<compile_context>
chip_gen: v5e
topology: v5e:2x2
jax: 0.10.0
libtpu: 0.0.40
codegen_flags: <defaults>
</compile_context>

<pallas_src>
import math
import jax
import jax.numpy as jnp
from jax.experimental import pallas as pl
from jax.experimental.pallas import tpu as pltpu

# ---- synthetic backbone / head configuration ---------------------------------
D_MODEL = 32        # fusion_block_config['d_model']
SEQ_LEN = 8         # fusion_block_config['seq_length']
DROPOUT = 0.1       # fusion_block_config['dropout'] (identity in eval mode)
NUM_CLASSES = 3
H1, H2 = 512, 256
BN_EPS = 1e-5
C_S1, C_S2 = 4, 6   # channels of the two satellite time series
C_TOK = C_S1 + C_S2 + 1          # per-token channels incl. day-of-year
FEAT = D_MODEL * SEQ_LEN         # 256 = flattened token width
OUT_PAD = 128       # logits padded to a lane-dense width; wrapper slices [:, :NUM_CLASSES]
MAX_BB = 256        # batch rows per grid step
VMEM_LIMIT_BYTES = 32 * 1024 * 1024


# ---- fused Pallas kernel -------------------------------------------------------
def fused_kernel(x_ref, wemb_ref, bemb_ref, invf_ref, ph_ref, wqkv_ref, wo_ref,
                 seg_ref, expm_ref, w1_ref, b1_ref, w2_ref, b2_ref, w3_ref, b3_ref,
                 o_ref):
    BB = x_ref.shape[0]
    T, D, F = SEQ_LEN, D_MODEL, FEAT

    # --- backbone: block-diagonal per-token embedding + raw-doy replication -----
    # one [BB, 88] @ [88, 512] matmul -> cols 0:256 = embedded tokens (flat),
    # cols 256:512 = day-of-year replicated over each token's 32 lanes.
    x = x_ref[...]                                                        # [BB, 88]
    ed = jnp.dot(x, wemb_ref[...], preferred_element_type=jnp.float32) + bemb_ref[...]
    emb = ed[:, :F]                                                       # [BB, 256]
    doy_rep = ed[:, F:]                                                   # [BB, 256]
    pe = jnp.sin(doy_rep * invf_ref[...] + ph_ref[...])                   # sinusoidal PE (EUP)
    tok = emb + pe                                                        # [BB, 256] lane-dense

    # --- fused Q|K|V projection, block-diagonal over tokens (K=256 MXU fill) ----
    qkv = jnp.dot(tok, wqkv_ref[...], preferred_element_type=jnp.float32)  # [BB, 768]
    q = qkv[:, :F]
    k = qkv[:, F:2 * F]
    v = qkv[:, 2 * F:]

    # --- attention scores: rolled key products + ONE shared segment-sum matmul --
    # (no batched einsum -> no per-batch serialized MXU matmuls; 1/sqrt(D) is
    #  folded into Wq in the wrapper)
    prods = []
    for sh in range(T):
        k_sh = k if sh == 0 else pltpu.roll(k, shift=sh * D, axis=1)
        prods.append(q * k_sh)                                            # [BB, 256] each
    prod_all = jnp.concatenate(prods, axis=0)                             # [T*BB, 256]
    s_all = jnp.dot(prod_all, seg_ref[...], preferred_element_type=jnp.float32)  # [T*BB, T]

    # softmax over keys == elementwise softmax across the T shift blocks
    sb = [s_all[sh * BB:(sh + 1) * BB, :] for sh in range(T)]             # [BB, T] each
    m = sb[0]
    for sh in range(1, T):
        m = jnp.maximum(m, sb[sh])
    es = [jnp.exp(b - m) for b in sb]
    l = es[0]
    for sh in range(1, T):
        l = l + es[sh]
    inv_l = pl.reciprocal(l, approx=True)                                 # EUP, nearly free
    p_all = jnp.concatenate([e * inv_l for e in es], axis=0)              # [T*BB, T]

    # --- p @ V: broadcast probs over each token's 32 lanes + rolled-V multiplies
    p_exp = jnp.dot(p_all, expm_ref[...], preferred_element_type=jnp.float32)  # [T*BB, 256]
    a = p_exp[:BB, :] * v
    for sh in range(1, T):
        a = a + p_exp[sh * BB:(sh + 1) * BB, :] * pltpu.roll(v, shift=sh * D, axis=1)

    # --- block-diagonal output projection + residual (already in head layout) ---
    y = jnp.dot(a, wo_ref[...], preferred_element_type=jnp.float32) + tok  # [BB, 256]

    # --- classification head (BN folded; Dropout = identity in eval mode) -------
    h = jnp.maximum(jnp.dot(y, w1_ref[...], preferred_element_type=jnp.float32)
                    + b1_ref[...], 0.0)                                    # [BB, 512]
    h = jnp.maximum(jnp.dot(h, w2_ref[...], preferred_element_type=jnp.float32)
                    + b2_ref[...], 0.0)                                    # [BB, 256]
    o_ref[...] = (jnp.dot(h, w3_ref[...], preferred_element_type=jnp.float32)
                  + b3_ref[...]).astype(o_ref.dtype)                       # [BB, 128]


# ---- wrapper -------------------------------------------------------------------
def _round_up(n, m):
    return ((n + m - 1) // m) * m


def _replicated(a):
    # full-array block, same block index at every grid step
    return pl.BlockSpec(a.shape, lambda b, _nd=a.ndim: (0,) * _nd)


def _blockdiag(w):
    # T diagonal copies of w  -> per-token weight applied in the flat layout
    return jnp.kron(jnp.eye(SEQ_LEN, dtype=jnp.float32), w.astype(jnp.float32))


def forward(s1, s2, doy, params):
    """backbone(s1, s2, doy) -> classification_head(x), fused in one Pallas kernel."""
    B, T, _ = s1.shape
    D, F = D_MODEL, FEAT

    # --- input: single flattened (B, T*(C+1)) stream, doy folded as last channel ---
    x = jnp.concatenate([s1.astype(jnp.float32), s2.astype(jnp.float32),
                         doy.astype(jnp.float32)[..., None]], axis=-1)     # [B, T, 11]
    x_flat = x.reshape(B, T * C_TOK)                                        # [B, 88]

    # --- wrapper-side weight folding (static XLA ops, negligible cost) ---
    we_tok = jnp.concatenate([params["we1"], params["we2"],
                              jnp.zeros((1, D), jnp.float32)], axis=0)      # [11, 32]
    doy_sel = jnp.concatenate([jnp.zeros((C_S1 + C_S2, D), jnp.float32),
                               jnp.ones((1, D), jnp.float32)], axis=0)      # [11, 32]
    w_emb = jnp.concatenate([_blockdiag(we_tok), _blockdiag(doy_sel)], axis=1)  # [88, 512]
    b_emb = jnp.concatenate([jnp.tile(params["be1"] + params["be2"], (1, T)),
                             jnp.zeros((1, F), jnp.float32)], axis=1)       # [1, 512]

    d_idx = jnp.arange(D, dtype=jnp.float32)
    invf = jnp.exp(jnp.floor(d_idx * 0.5) * (-2.0 * math.log(10000.0) / D))
    phase = jnp.where(jnp.mod(jnp.arange(D), 2) == 0, 0.0,
                      math.pi * 0.5).astype(jnp.float32)
    invf_flat = jnp.tile(invf, (T,))[None, :]                               # [1, 256]
    ph_flat = jnp.tile(phase, (T,))[None, :]                                # [1, 256]

    wqkv = jnp.concatenate([_blockdiag(params["wq"] * (1.0 / math.sqrt(D))),
                            _blockdiag(params["wk"]),
                            _blockdiag(params["wv"])], axis=1)              # [256, 768]
    wo = _blockdiag(params["wo"])                                           # [256, 256]

    seg = jnp.kron(jnp.eye(T, dtype=jnp.float32),
                   jnp.ones((D, 1), jnp.float32))                           # [256, 8]
    expm = jnp.kron(jnp.eye(T, dtype=jnp.float32),
                    jnp.ones((1, D), jnp.float32))                          # [8, 256]

    w1 = params["w1"] * params["sc1"]                                       # BN1 folded
    b1 = params["b1"] * params["sc1"] + params["sh1"]
    w2 = params["w2"] * params["sc2"]                                       # BN2 folded
    b2 = params["b2"] * params["sc2"] + params["sh2"]
    w3 = jnp.pad(params["w3"], ((0, 0), (0, OUT_PAD - NUM_CLASSES)))        # lane-dense logits
    b3 = jnp.pad(params["b3"], ((0, 0), (0, OUT_PAD - NUM_CLASSES)))

    # --- batch tiling (>=2 grid steps when the batch allows, for v7x megacore) ---
    BB = min(MAX_BB, _round_up(B, 8))
    if B > 16 and _round_up(B, BB) // BB < 2:
        BB = max(8, _round_up((BB + 1) // 2, 8))
    Bp = _round_up(B, BB)
    if Bp != B:
        x_flat = jnp.pad(x_flat, ((0, Bp - B), (0, 0)))

    weights = (w_emb, b_emb, invf_flat, ph_flat, wqkv, wo, seg, expm,
               w1, b1, w2, b2, w3, b3)
    in_specs = [pl.BlockSpec((BB, T * C_TOK), lambda b: (b, 0))]
    in_specs += [_replicated(w) for w in weights]

    out = pl.pallas_call(
        fused_kernel,
        out_shape=jax.ShapeDtypeStruct((Bp, OUT_PAD), jnp.float32),
        grid=(Bp // BB,),
        in_specs=in_specs,
        out_specs=pl.BlockSpec((BB, OUT_PAD), lambda b: (b, 0)),
        compiler_params=pltpu.CompilerParams(
            dimension_semantics=("parallel",),
            vmem_limit_bytes=VMEM_LIMIT_BYTES),
    )(x_flat, *weights)
    return out[:B, :NUM_CLASSES]


# ---- glue: positional encoding, parameter init, pure-JAX reference --------------
def sinusoidal_pe(doy, d):
    i = jnp.arange(d // 2, dtype=jnp.float32)
    div = jnp.power(10000.0, 2.0 * i / d)                 # [d/2]
    ang = doy[..., None] / div                            # [B, T, d/2]
    pe = jnp.stack([jnp.sin(ang), jnp.cos(ang)], axis=-1)
    return pe.reshape(doy.shape[0], doy.shape[1], d).astype(jnp.float32)


def init_params(key):
    ks = jax.random.split(key, 24)
    n = lambda k, shape, s=0.05: (s * jax.random.normal(k, shape)).astype(jnp.float32)
    feat = D_MODEL * SEQ_LEN
    p = {
        # backbone fusion block
        "we1": n(ks[0], (C_S1, D_MODEL)), "be1": n(ks[1], (1, D_MODEL)),
        "we2": n(ks[2], (C_S2, D_MODEL)), "be2": n(ks[3], (1, D_MODEL)),
        "wq": n(ks[4], (D_MODEL, D_MODEL)), "wk": n(ks[5], (D_MODEL, D_MODEL)),
        "wv": n(ks[6], (D_MODEL, D_MODEL)), "wo": n(ks[7], (D_MODEL, D_MODEL)),
        # classification head linears
        "w1": n(ks[8], (feat, H1)), "b1": n(ks[9], (1, H1)),
        "w2": n(ks[10], (H1, H2)), "b2": n(ks[11], (1, H2)),
        "w3": n(ks[12], (H2, NUM_CLASSES)), "b3": n(ks[13], (1, NUM_CLASSES)),
    }
    # BatchNorm1d params + running stats folded into scale/shift (eval mode)
    for name, dim, k0 in (("1", H1, 14), ("2", H2, 18)):
        gamma = 1.0 + n(ks[k0], (1, dim), 0.1)
        beta = n(ks[k0 + 1], (1, dim), 0.1)
        rmean = n(ks[k0 + 2], (1, dim), 0.1)
        rvar = 1.0 + jnp.abs(n(ks[k0 + 3], (1, dim), 0.1))
        scale = gamma / jnp.sqrt(rvar + BN_EPS)
        p["sc" + name] = scale.astype(jnp.float32)
        p["sh" + name] = (beta - rmean * scale).astype(jnp.float32)
    return p


def reference_forward(s1, s2, doy, p):
    pe = sinusoidal_pe(doy, D_MODEL)
    e1 = jnp.einsum("btc,cd->btd", s1, p["we1"]) + p["be1"][None]
    e2 = jnp.einsum("btc,cd->btd", s2, p["we2"]) + p["be2"][None]
    tok = e1 + e2 + pe
    q = jnp.einsum("btd,de->bte", tok, p["wq"])
    k = jnp.einsum("btd,de->bte", tok, p["wk"])
    v = jnp.einsum("btd,de->bte", tok, p["wv"])
    s = jnp.einsum("bqd,bkd->bqk", q, k) / math.sqrt(D_MODEL)
    a = jax.nn.softmax(s, axis=-1)
    out = jnp.einsum("bqk,bkd->bqd", a, v)
    out = jnp.einsum("btd,de->bte", out, p["wo"]) + tok
    x = out.reshape(out.shape[0], -1)
    h = jnp.maximum((x @ p["w1"] + p["b1"]) * p["sc1"] + p["sh1"], 0.0)
    h = jnp.maximum((h @ p["w2"] + p["b2"]) * p["sc2"] + p["sh2"], 0.0)
    return h @ p["w3"] + p["b3"]


if __name__ == "__main__":
    key = jax.random.PRNGKey(0)
    k_s1, k_s2, k_doy, k_par = jax.random.split(key, 4)
    B = 2
    s1 = jax.random.normal(k_s1, (B, SEQ_LEN, C_S1), dtype=jnp.float32)
    s2 = jax.random.normal(k_s2, (B, SEQ_LEN, C_S2), dtype=jnp.float32)
    doy = jax.random.randint(k_doy, (B, SEQ_LEN), 0, 366).astype(jnp.float32)
    params = init_params(k_par)

    out = jax.block_until_ready(jax.jit(forward)(s1, s2, doy, params))
    ref = jax.block_until_ready(reference_forward(s1, s2, doy, params))

    assert out.shape == (B, NUM_CLASSES), out.shape
    assert bool(jnp.allclose(out, ref, rtol=1e-3, atol=1e-3)), (out, ref)
    print("KERNEL_OK")
</pallas_src>

<mosaic_0001>
module attributes {stable_mosaic.version = 11 : i64} {
  func.func @fused_kernel(%arg0: i32, %arg1: memref<8x88xf32, #tpu.memory_space<vmem>>, %arg2: memref<88x512xf32, #tpu.memory_space<vmem>>, %arg3: memref<1x512xf32, #tpu.memory_space<vmem>>, %arg4: memref<1x256xf32, #tpu.memory_space<vmem>>, %arg5: memref<1x256xf32, #tpu.memory_space<vmem>>, %arg6: memref<256x768xf32, #tpu.memory_space<vmem>>, %arg7: memref<256x256xf32, #tpu.memory_space<vmem>>, %arg8: memref<256x8xf32, #tpu.memory_space<vmem>>, %arg9: memref<8x256xf32, #tpu.memory_space<vmem>>, %arg10: memref<256x512xf32, #tpu.memory_space<vmem>>, %arg11: memref<1x512xf32, #tpu.memory_space<vmem>>, %arg12: memref<512x256xf32, #tpu.memory_space<vmem>>, %arg13: memref<1x256xf32, #tpu.memory_space<vmem>>, %arg14: memref<256x128xf32, #tpu.memory_space<vmem>>, %arg15: memref<1x128xf32, #tpu.memory_space<vmem>>, %arg16: memref<8x128xf32, #tpu.memory_space<vmem>>) attributes {dimension_semantics = [#tpu.dimension_semantics<parallel>], iteration_bounds = array<i64: 1>, scalar_prefetch = 0 : i64, scratch_operands = 0 : i64, tpu.core_type = #tpu.core_type<tc>, window_params = [{transform_indices = @transform_0, window_bounds = array<i64: 8, 88>}, {pipeline_mode = #tpu.pipeline_mode<synchronous>, transform_indices = @transform_1, window_bounds = array<i64: 88, 512>}, {pipeline_mode = #tpu.pipeline_mode<synchronous>, transform_indices = @transform_2, window_bounds = array<i64: 1, 512>}, {pipeline_mode = #tpu.pipeline_mode<synchronous>, transform_indices = @transform_3, window_bounds = array<i64: 1, 256>}, {pipeline_mode = #tpu.pipeline_mode<synchronous>, transform_indices = @transform_4, window_bounds = array<i64: 1, 256>}, {pipeline_mode = #tpu.pipeline_mode<synchronous>, transform_indices = @transform_5, window_bounds = array<i64: 256, 768>}, {pipeline_mode = #tpu.pipeline_mode<synchronous>, transform_indices = @transform_6, window_bounds = array<i64: 256, 256>}, {pipeline_mode = #tpu.pipeline_mode<synchronous>, transform_indices = @transform_7, window_bounds = array<i64: 256, 8>}, {pipeline_mode = #tpu.pipeline_mode<synchronous>, transform_indices = @transform_8, window_bounds = array<i64: 8, 256>}, {pipeline_mode = #tpu.pipeline_mode<synchronous>, transform_indices = @transform_9, window_bounds = array<i64: 256, 512>}, {pipeline_mode = #tpu.pipeline_mode<synchronous>, transform_indices = @transform_10, window_bounds = array<i64: 1, 512>}, {pipeline_mode = #tpu.pipeline_mode<synchronous>, transform_indices = @transform_11, window_bounds = array<i64: 512, 256>}, {pipeline_mode = #tpu.pipeline_mode<synchronous>, transform_indices = @transform_12, window_bounds = array<i64: 1, 256>}, {pipeline_mode = #tpu.pipeline_mode<synchronous>, transform_indices = @transform_13, window_bounds = array<i64: 256, 128>}, {pipeline_mode = #tpu.pipeline_mode<synchronous>, transform_indices = @transform_14, window_bounds = array<i64: 1, 128>}, {transform_indices = @transform_15, window_bounds = array<i64: 8, 128>}]} {
    %c0 = arith.constant 0 : index
    %c0_0 = arith.constant 0 : index
    %0 = vector.load %arg1[%c0, %c0_0] : memref<8x88xf32, #tpu.memory_space<vmem>>, vector<8x88xf32>
    %c0_1 = arith.constant 0 : index
    %c0_2 = arith.constant 0 : index
    %1 = vector.load %arg2[%c0_1, %c0_2] : memref<88x512xf32, #tpu.memory_space<vmem>>, vector<88x512xf32>
    %cst = arith.constant dense<0.000000e+00> : vector<8x512xf32>
    %2 = tpu.matmul %0, %1, %cst {dimension_numbers = #tpu.dot_dimension_numbers<[1], [0], [0], [1], [0, 0, 1, 1], [], []>} : vector<8x88xf32>, vector<88x512xf32>, vector<8x512xf32> -> vector<8x512xf32>
    %c0_3 = arith.constant 0 : index
    %c0_4 = arith.constant 0 : index
    %3 = vector.load %arg3[%c0_3, %c0_4] : memref<1x512xf32, #tpu.memory_space<vmem>>, vector<1x512xf32>
    %4 = vector.broadcast %3 : vector<1x512xf32> to vector<8x512xf32>
    %5 = arith.addf %2, %4 : vector<8x512xf32>
    %6 = vector.extract_strided_slice %5 {offsets = [0, 0], sizes = [8, 256], strides = [1, 1]} : vector<8x512xf32> to vector<8x256xf32>
    %7 = vector.extract_strided_slice %5 {offsets = [0, 256], sizes = [8, 256], strides = [1, 1]} : vector<8x512xf32> to vector<8x256xf32>
    %c0_5 = arith.constant 0 : index
    %c0_6 = arith.constant 0 : index
    %8 = vector.load %arg4[%c0_5, %c0_6] : memref<1x256xf32, #tpu.memory_space<vmem>>, vector<1x256xf32>
    %9 = vector.broadcast %8 : vector<1x256xf32> to vector<8x256xf32>
    %10 = arith.mulf %7, %9 : vector<8x256xf32>
    %c0_7 = arith.constant 0 : index
    %c0_8 = arith.constant 0 : index
    %11 = vector.load %arg5[%c0_7, %c0_8] : memref<1x256xf32, #tpu.memory_space<vmem>>, vector<1x256xf32>
    %12 = vector.broadcast %11 : vector<1x256xf32> to vector<8x256xf32>
    %13 = arith.addf %10, %12 : vector<8x256xf32>
    %14 = math.sin %13 : vector<8x256xf32>
    %15 = arith.addf %6, %14 : vector<8x256xf32>
    %c0_9 = arith.constant 0 : index
    %c0_10 = arith.constant 0 : index
    %16 = vector.load %arg6[%c0_9, %c0_10] : memref<256x768xf32, #tpu.memory_space<vmem>>, vector<256x768xf32>
    %cst_11 = arith.constant dense<0.000000e+00> : vector<8x768xf32>
    %17 = tpu.matmul %15, %16, %cst_11 {dimension_numbers = #tpu.dot_dimension_numbers<[1], [0], [0], [1], [0, 0, 1, 1], [], []>} : vector<8x256xf32>, vector<256x768xf32>, vector<8x768xf32> -> vector<8x768xf32>
    %18 = vector.extract_strided_slice %17 {offsets = [0, 0], sizes = [8, 256], strides = [1, 1]} : vector<8x768xf32> to vector<8x256xf32>
    %19 = vector.extract_strided_slice %17 {offsets = [0, 256], sizes = [8, 256], strides = [1, 1]} : vector<8x768xf32> to vector<8x256xf32>
    %20 = vector.extract_strided_slice %17 {offsets = [0, 512], sizes = [8, 256], strides = [1, 1]} : vector<8x768xf32> to vector<8x256xf32>
    %21 = arith.mulf %18, %19 : vector<8x256xf32>
    %c32_i32 = arith.constant 32 : i32
    %22 = tpu.dynamic_rotate %19 by %c32_i32 dim 1 : vector<8x256xf32>, i32 -> vector<8x256xf32>
    %23 = arith.mulf %18, %22 : vector<8x256xf32>
    %c64_i32 = arith.constant 64 : i32
    %24 = tpu.dynamic_rotate %19 by %c64_i32 dim 1 : vector<8x256xf32>, i32 -> vector<8x256xf32>
    %25 = arith.mulf %18, %24 : vector<8x256xf32>
    %c96_i32 = arith.constant 96 : i32
    %26 = tpu.dynamic_rotate %19 by %c96_i32 dim 1 : vector<8x256xf32>, i32 -> vector<8x256xf32>
    %27 = arith.mulf %18, %26 : vector<8x256xf32>
    %c128_i32 = arith.constant 128 : i32
    %28 = tpu.dynamic_rotate %19 by %c128_i32 dim 1 : vector<8x256xf32>, i32 -> vector<8x256xf32>
    %29 = arith.mulf %18, %28 : vector<8x256xf32>
    %c160_i32 = arith.constant 160 : i32
    %30 = tpu.dynamic_rotate %19 by %c160_i32 dim 1 : vector<8x256xf32>, i32 -> vector<8x256xf32>
    %31 = arith.mulf %18, %30 : vector<8x256xf32>
    %c192_i32 = arith.constant 192 : i32
    %32 = tpu.dynamic_rotate %19 by %c192_i32 dim 1 : vector<8x256xf32>, i32 -> vector<8x256xf32>
    %33 = arith.mulf %18, %32 : vector<8x256xf32>
    %c224_i32 = arith.constant 224 : i32
    %34 = tpu.dynamic_rotate %19 by %c224_i32 dim 1 : vector<8x256xf32>, i32 -> vector<8x256xf32>
    %35 = arith.mulf %18, %34 : vector<8x256xf32>
    %36 = tpu.concatenate %21, %23, %25, %27, %29, %31, %33, %35 in 0 : vector<8x256xf32>, vector<8x256xf32>, vector<8x256xf32>, vector<8x256xf32>, vector<8x256xf32>, vector<8x256xf32>, vector<8x256xf32>, vector<8x256xf32> -> vector<64x256xf32>
    %c0_12 = arith.constant 0 : index
    %c0_13 = arith.constant 0 : index
    %37 = vector.load %arg8[%c0_12, %c0_13] : memref<256x8xf32, #tpu.memory_space<vmem>>, vector<256x8xf32>
    %cst_14 = arith.constant dense<0.000000e+00> : vector<64x8xf32>
    %38 = tpu.matmul %36, %37, %cst_14 {dimension_numbers = #tpu.dot_dimension_numbers<[1], [0], [0], [1], [0, 0, 1, 1], [], []>} : vector<64x256xf32>, vector<256x8xf32>, vector<64x8xf32> -> vector<64x8xf32>
    %39 = vector.extract_strided_slice %38 {offsets = [0, 0], sizes = [8, 8], strides = [1, 1]} : vector<64x8xf32> to vector<8x8xf32>
    %40 = vector.extract_strided_slice %38 {offsets = [8, 0], sizes = [8, 8], strides = [1, 1]} : vector<64x8xf32> to vector<8x8xf32>
    %41 = vector.extract_strided_slice %38 {offsets = [16, 0], sizes = [8, 8], strides = [1, 1]} : vector<64x8xf32> to vector<8x8xf32>
    %42 = vector.extract_strided_slice %38 {offsets = [24, 0], sizes = [8, 8], strides = [1, 1]} : vector<64x8xf32> to vector<8x8xf32>
    %43 = vector.extract_strided_slice %38 {offsets = [32, 0], sizes = [8, 8], strides = [1, 1]} : vector<64x8xf32> to vector<8x8xf32>
    %44 = vector.extract_strided_slice %38 {offsets = [40, 0], sizes = [8, 8], strides = [1, 1]} : vector<64x8xf32> to vector<8x8xf32>
    %45 = vector.extract_strided_slice %38 {offsets = [48, 0], sizes = [8, 8], strides = [1, 1]} : vector<64x8xf32> to vector<8x8xf32>
    %46 = vector.extract_strided_slice %38 {offsets = [56, 0], sizes = [8, 8], strides = [1, 1]} : vector<64x8xf32> to vector<8x8xf32>
    %47 = arith.maximumf %39, %40 : vector<8x8xf32>
    %48 = arith.maximumf %47, %41 : vector<8x8xf32>
    %49 = arith.maximumf %48, %42 : vector<8x8xf32>
    %50 = arith.maximumf %49, %43 : vector<8x8xf32>
    %51 = arith.maximumf %50, %44 : vector<8x8xf32>
    %52 = arith.maximumf %51, %45 : vector<8x8xf32>
    %53 = arith.maximumf %52, %46 : vector<8x8xf32>
    %54 = arith.subf %39, %53 : vector<8x8xf32>
    %55 = math.exp %54 : vector<8x8xf32>
    %56 = arith.subf %40, %53 : vector<8x8xf32>
    %57 = math.exp %56 : vector<8x8xf32>
    %58 = arith.subf %41, %53 : vector<8x8xf32>
    %59 = math.exp %58 : vector<8x8xf32>
    %60 = arith.subf %42, %53 : vector<8x8xf32>
    %61 = math.exp %60 : vector<8x8xf32>
    %62 = arith.subf %43, %53 : vector<8x8xf32>
    %63 = math.exp %62 : vector<8x8xf32>
    %64 = arith.subf %44, %53 : vector<8x8xf32>
    %65 = math.exp %64 : vector<8x8xf32>
    %66 = arith.subf %45, %53 : vector<8x8xf32>
    %67 = math.exp %66 : vector<8x8xf32>
    %68 = arith.subf %46, %53 : vector<8x8xf32>
    %69 = math.exp %68 : vector<8x8xf32>
    %70 = arith.addf %55, %57 : vector<8x8xf32>
    %71 = arith.addf %70, %59 : vector<8x8xf32>
    %72 = arith.addf %71, %61 : vector<8x8xf32>
    %73 = arith.addf %72, %63 : vector<8x8xf32>
    %74 = arith.addf %73, %65 : vector<8x8xf32>
    %75 = arith.addf %74, %67 : vector<8x8xf32>
    %76 = arith.addf %75, %69 : vector<8x8xf32>
    %77 = tpu.reciprocal %76 {approx = true} : vector<8x8xf32> -> vector<8x8xf32>
    %78 = arith.mulf %55, %77 : vector<8x8xf32>
    %79 = arith.mulf %57, %77 : vector<8x8xf32>
    %80 = arith.mulf %59, %77 : vector<8x8xf32>
    %81 = arith.mulf %61, %77 : vector<8x8xf32>
    %82 = arith.mulf %63, %77 : vector<8x8xf32>
    %83 = arith.mulf %65, %77 : vector<8x8xf32>
    %84 = arith.mulf %67, %77 : vector<8x8xf32>
    %85 = arith.mulf %69, %77 : vector<8x8xf32>
    %86 = tpu.concatenate %78, %79, %80, %81, %82, %83, %84, %85 in 0 : vector<8x8xf32>, vector<8x8xf32>, vector<8x8xf32>, vector<8x8xf32>, vector<8x8xf32>, vector<8x8xf32>, vector<8x8xf32>, vector<8x8xf32> -> vector<64x8xf32>
    %c0_15 = arith.constant 0 : index
    %c0_16 = arith.constant 0 : index
    %87 = vector.load %arg9[%c0_15, %c0_16] : memref<8x256xf32, #tpu.memory_space<vmem>>, vector<8x256xf32>
    %cst_17 = arith.constant dense<0.000000e+00> : vector<64x256xf32>
    %88 = tpu.matmul %86, %87, %cst_17 {dimension_numbers = #tpu.dot_dimension_numbers<[1], [0], [0], [1], [0, 0, 1, 1], [], []>} : vector<64x8xf32>, vector<8x256xf32>, vector<64x256xf32> -> vector<64x256xf32>
    %89 = vector.extract_strided_slice %88 {offsets = [0, 0], sizes = [8, 256], strides = [1, 1]} : vector<64x256xf32> to vector<8x256xf32>
    %90 = arith.mulf %89, %20 : vector<8x256xf32>
    %91 = vector.extract_strided_slice %88 {offsets = [8, 0], sizes = [8, 256], strides = [1, 1]} : vector<64x256xf32> to vector<8x256xf32>
    %c32_i32_18 = arith.constant 32 : i32
    %92 = tpu.dynamic_rotate %20 by %c32_i32_18 dim 1 : vector<8x256xf32>, i32 -> vector<8x256xf32>
    %93 = arith.mulf %91, %92 : vector<8x256xf32>
    %94 = arith.addf %90, %93 : vector<8x256xf32>
    %95 = vector.extract_strided_slice %88 {offsets = [16, 0], sizes = [8, 256], strides = [1, 1]} : vector<64x256xf32> to vector<8x256xf32>
    %c64_i32_19 = arith.constant 64 : i32
    %96 = tpu.dynamic_rotate %20 by %c64_i32_19 dim 1 : vector<8x256xf32>, i32 -> vector<8x256xf32>
    %97 = arith.mulf %95, %96 : vector<8x256xf32>
    %98 = arith.addf %94, %97 : vector<8x256xf32>
    %99 = vector.extract_strided_slice %88 {offsets = [24, 0], sizes = [8, 256], strides = [1, 1]} : vector<64x256xf32> to vector<8x256xf32>
    %c96_i32_20 = arith.constant 96 : i32
    %100 = tpu.dynamic_rotate %20 by %c96_i32_20 dim 1 : vector<8x256xf32>, i32 -> vector<8x256xf32>
    %101 = arith.mulf %99, %100 : vector<8x256xf32>
    %102 = arith.addf %98, %101 : vector<8x256xf32>
    %103 = vector.extract_strided_slice %88 {offsets = [32, 0], sizes = [8, 256], strides = [1, 1]} : vector<64x256xf32> to vector<8x256xf32>
    %c128_i32_21 = arith.constant 128 : i32
    %104 = tpu.dynamic_rotate %20 by %c128_i32_21 dim 1 : vector<8x256xf32>, i32 -> vector<8x256xf32>
    %105 = arith.mulf %103, %104 : vector<8x256xf32>
    %106 = arith.addf %102, %105 : vector<8x256xf32>
    %107 = vector.extract_strided_slice %88 {offsets = [40, 0], sizes = [8, 256], strides = [1, 1]} : vector<64x256xf32> to vector<8x256xf32>
    %c160_i32_22 = arith.constant 160 : i32
    %108 = tpu.dynamic_rotate %20 by %c160_i32_22 dim 1 : vector<8x256xf32>, i32 -> vector<8x256xf32>
    %109 = arith.mulf %107, %108 : vector<8x256xf32>
    %110 = arith.addf %106, %109 : vector<8x256xf32>
    %111 = vector.extract_strided_slice %88 {offsets = [48, 0], sizes = [8, 256], strides = [1, 1]} : vector<64x256xf32> to vector<8x256xf32>
    %c192_i32_23 = arith.constant 192 : i32
    %112 = tpu.dynamic_rotate %20 by %c192_i32_23 dim 1 : vector<8x256xf32>, i32 -> vector<8x256xf32>
    %113 = arith.mulf %111, %112 : vector<8x256xf32>
    %114 = arith.addf %110, %113 : vector<8x256xf32>
    %115 = vector.extract_strided_slice %88 {offsets = [56, 0], sizes = [8, 256], strides = [1, 1]} : vector<64x256xf32> to vector<8x256xf32>
    %c224_i32_24 = arith.constant 224 : i32
    %116 = tpu.dynamic_rotate %20 by %c224_i32_24 dim 1 : vector<8x256xf32>, i32 -> vector<8x256xf32>
    %117 = arith.mulf %115, %116 : vector<8x256xf32>
    %118 = arith.addf %114, %117 : vector<8x256xf32>
    %c0_25 = arith.constant 0 : index
    %c0_26 = arith.constant 0 : index
    %119 = vector.load %arg7[%c0_25, %c0_26] : memref<256x256xf32, #tpu.memory_space<vmem>>, vector<256x256xf32>
    %cst_27 = arith.constant dense<0.000000e+00> : vector<8x256xf32>
    %120 = tpu.matmul %118, %119, %cst_27 {dimension_numbers = #tpu.dot_dimension_numbers<[1], [0], [0], [1], [0, 0, 1, 1], [], []>} : vector<8x256xf32>, vector<256x256xf32>, vector<8x256xf32> -> vector<8x256xf32>
    %121 = arith.addf %120, %15 : vector<8x256xf32>
    %c0_28 = arith.constant 0 : index
    %c0_29 = arith.constant 0 : index
    %122 = vector.load %arg10[%c0_28, %c0_29] : memref<256x512xf32, #tpu.memory_space<vmem>>, vector<256x512xf32>
    %cst_30 = arith.constant dense<0.000000e+00> : vector<8x512xf32>
    %123 = tpu.matmul %121, %122, %cst_30 {dimension_numbers = #tpu.dot_dimension_numbers<[1], [0], [0], [1], [0, 0, 1, 1], [], []>} : vector<8x256xf32>, vector<256x512xf32>, vector<8x512xf32> -> vector<8x512xf32>
    %c0_31 = arith.constant 0 : index
    %c0_32 = arith.constant 0 : index
    %124 = vector.load %arg11[%c0_31, %c0_32] : memref<1x512xf32, #tpu.memory_space<vmem>>, vector<1x512xf32>
    %125 = vector.broadcast %124 : vector<1x512xf32> to vector<8x512xf32>
    %126 = arith.addf %123, %125 : vector<8x512xf32>
    %cst_33 = arith.constant 0.000000e+00 : f32
    %127 = vector.broadcast %cst_33 : f32 to vector<8x512xf32>
    %128 = arith.maximumf %126, %127 : vector<8x512xf32>
    %c0_34 = arith.constant 0 : index
    %c0_35 = arith.constant 0 : index
    %129 = vector.load %arg12[%c0_34, %c0_35] : memref<512x256xf32, #tpu.memory_space<vmem>>, vector<512x256xf32>
    %cst_36 = arith.constant dense<0.000000e+00> : vector<8x256xf32>
    %130 = tpu.matmul %128, %129, %cst_36 {dimension_numbers = #tpu.dot_dimension_numbers<[1], [0], [0], [1], [0, 0, 1, 1], [], []>} : vector<8x512xf32>, vector<512x256xf32>, vector<8x256xf32> -> vector<8x256xf32>
    %c0_37 = arith.constant 0 : index
    %c0_38 = arith.constant 0 : index
    %131 = vector.load %arg13[%c0_37, %c0_38] : memref<1x256xf32, #tpu.memory_space<vmem>>, vector<1x256xf32>
    %132 = vector.broadcast %131 : vector<1x256xf32> to vector<8x256xf32>
    %133 = arith.addf %130, %132 : vector<8x256xf32>
    %cst_39 = arith.constant 0.000000e+00 : f32
    %134 = vector.broadcast %cst_39 : f32 to vector<8x256xf32>
    %135 = arith.maximumf %133, %134 : vector<8x256xf32>
    %c0_40 = arith.constant 0 : index
    %c0_41 = arith.constant 0 : index
    %136 = vector.load %arg14[%c0_40, %c0_41] : memref<256x128xf32, #tpu.memory_space<vmem>>, vector<256x128xf32>
    %cst_42 = arith.constant dense<0.000000e+00> : vector<8x128xf32>
    %137 = tpu.matmul %135, %136, %cst_42 {dimension_numbers = #tpu.dot_dimension_numbers<[1], [0], [0], [1], [0, 0, 1, 1], [], []>} : vector<8x256xf32>, vector<256x128xf32>, vector<8x128xf32> -> vector<8x128xf32>
    %c0_43 = arith.constant 0 : index
    %c0_44 = arith.constant 0 : index
    %138 = vector.load %arg15[%c0_43, %c0_44] : memref<1x128xf32, #tpu.memory_space<vmem>>, vector<1x128xf32>
    %139 = vector.broadcast %138 : vector<1x128xf32> to vector<8x128xf32>
    %140 = arith.addf %137, %139 : vector<8x128xf32>
    %c0_45 = arith.constant 0 : index
    %c0_46 = arith.constant 0 : index
    %141 = vector.load %arg16[%c0_45, %c0_46] : memref<8x128xf32, #tpu.memory_space<vmem>>, vector<8x128xf32>
    tpu.vector_store %arg16[%c0_45, %c0_46], %140 {strides = array<i32>} : memref<8x128xf32, #tpu.memory_space<vmem>>, vector<8x128xf32>,
    return
  }
  func.func @transform_0(%arg0: i32) -> (i32, i32) {
    %c0_i32 = arith.constant 0 : i32
    %c0_i32_0 = arith.constant 0 : i32
    return %arg0, %c0_i32 : i32, i32
  }
  func.func @transform_1(%arg0: i32) -> (i32, i32) {
    %c0_i32 = arith.constant 0 : i32
    %c0_i32_0 = arith.constant 0 : i32
    %c0_i32_1 = arith.constant 0 : i32
    return %c0_i32, %c0_i32_0 : i32, i32
  }
  func.func @transform_2(%arg0: i32) -> (i32, i32) {
    %c0_i32 = arith.constant 0 : i32
    %c0_i32_0 = arith.constant 0 : i32
    %c0_i32_1 = arith.constant 0 : i32
    return %c0_i32, %c0_i32_0 : i32, i32
  }
  func.func @transform_3(%arg0: i32) -> (i32, i32) {
    %c0_i32 = arith.constant 0 : i32
    %c0_i32_0 = arith.constant 0 : i32
    %c0_i32_1 = arith.constant 0 : i32
    return %c0_i32, %c0_i32_0 : i32, i32
  }
  func.func @transform_4(%arg0: i32) -> (i32, i32) {
    %c0_i32 = arith.constant 0 : i32
    %c0_i32_0 = arith.constant 0 : i32
    %c0_i32_1 = arith.constant 0 : i32
    return %c0_i32, %c0_i32_0 : i32, i32
  }
  func.func @transform_5(%arg0: i32) -> (i32, i32) {
    %c0_i32 = arith.constant 0 : i32
    %c0_i32_0 = arith.constant 0 : i32
    %c0_i32_1 = arith.constant 0 : i32
    return %c0_i32, %c0_i32_0 : i32, i32
  }
  func.func @transform_6(%arg0: i32) -> (i32, i32) {
    %c0_i32 = arith.constant 0 : i32
    %c0_i32_0 = arith.constant 0 : i32
    %c0_i32_1 = arith.constant 0 : i32
    return %c0_i32, %c0_i32_0 : i32, i32
  }
  func.func @transform_7(%arg0: i32) -> (i32, i32) {
    %c0_i32 = arith.constant 0 : i32
    %c0_i32_0 = arith.constant 0 : i32
    %c0_i32_1 = arith.constant 0 : i32
    return %c0_i32, %c0_i32_0 : i32, i32
  }
  func.func @transform_8(%arg0: i32) -> (i32, i32) {
    %c0_i32 = arith.constant 0 : i32
    %c0_i32_0 = arith.constant 0 : i32
    %c0_i32_1 = arith.constant 0 : i32
    return %c0_i32, %c0_i32_0 : i32, i32
  }
  func.func @transform_9(%arg0: i32) -> (i32, i32) {
    %c0_i32 = arith.constant 0 : i32
    %c0_i32_0 = arith.constant 0 : i32
    %c0_i32_1 = arith.constant 0 : i32
    return %c0_i32, %c0_i32_0 : i32, i32
  }
  func.func @transform_10(%arg0: i32) -> (i32, i32) {
    %c0_i32 = arith.constant 0 : i32
    %c0_i32_0 = arith.constant 0 : i32
    %c0_i32_1 = arith.constant 0 : i32
    return %c0_i32, %c0_i32_0 : i32, i32
  }
  func.func @transform_11(%arg0: i32) -> (i32, i32) {
    %c0_i32 = arith.constant 0 : i32
    %c0_i32_0 = arith.constant 0 : i32
    %c0_i32_1 = arith.constant 0 : i32
    return %c0_i32, %c0_i32_0 : i32, i32
  }
  func.func @transform_12(%arg0: i32) -> (i32, i32) {
    %c0_i32 = arith.constant 0 : i32
    %c0_i32_0 = arith.constant 0 : i32
    %c0_i32_1 = arith.constant 0 : i32
    return %c0_i32, %c0_i32_0 : i32, i32
  }
  func.func @transform_13(%arg0: i32) -> (i32, i32) {
    %c0_i32 = arith.constant 0 : i32
    %c0_i32_0 = arith.constant 0 : i32
    %c0_i32_1 = arith.constant 0 : i32
    return %c0_i32, %c0_i32_0 : i32, i32
  }
  func.func @transform_14(%arg0: i32) -> (i32, i32) {
    %c0_i32 = arith.constant 0 : i32
    %c0_i32_0 = arith.constant 0 : i32
    %c0_i32_1 = arith.constant 0 : i32
    return %c0_i32, %c0_i32_0 : i32, i32
  }
  func.func @transform_15(%arg0: i32) -> (i32, i32) {
    %c0_i32 = arith.constant 0 : i32
    %c0_i32_0 = arith.constant 0 : i32
    return %arg0, %c0_i32 : i32, i32
  }
}

</mosaic_0001>

<llo_original>
// kernel: forward.1
$region0: #{forward.1}
  #allocation0 [shape = 'u32[]', space=smem, size = 0x4, offset = 0x4, fixed_abs, tag = 'smem constant byte address 0x4 - core index']
  #allocation1 [shape = 'u32[72,128]{1,0:T(1,128)}', space=vmem, size = 0x9000, scoped, tag = 'internal scratch']
  %s0 = inlined_call_operand.vmem [shape: f32[8,88], index: 0, kind: input, shape index: {}]
  %s1 = inlined_call_operand.vmem [shape: f32[88,512], index: 1, kind: input, shape index: {}]
  %s2 = inlined_call_operand.vmem [shape: f32[1,512], index: 2, kind: input, shape index: {}]
  %s3 = inlined_call_operand.vmem [shape: f32[1,256], index: 3, kind: input, shape index: {}]
  %s4 = inlined_call_operand.vmem [shape: f32[1,256], index: 4, kind: input, shape index: {}]
  %s5 = inlined_call_operand.vmem [shape: f32[256,768], index: 5, kind: input, shape index: {}]
  %s6 = inlined_call_operand.vmem [shape: f32[256,256], index: 6, kind: input, shape index: {}]
  %s7 = inlined_call_operand.vmem [shape: f32[256,8], index: 7, kind: input, shape index: {}]
  %s8 = inlined_call_operand.vmem [shape: f32[8,256], index: 8, kind: input, shape index: {}]
  %s9 = inlined_call_operand.vmem [shape: f32[256,512], index: 9, kind: input, shape index: {}]
  %s10 = inlined_call_operand.vmem [shape: f32[1,512], index: 10, kind: input, shape index: {}]
  %s11 = inlined_call_operand.vmem [shape: f32[512,256], index: 11, kind: input, shape index: {}]
  %s12 = inlined_call_operand.vmem [shape: f32[1,256], index: 12, kind: input, shape index: {}]
  %s13 = inlined_call_operand.vmem [shape: f32[256,128], index: 13, kind: input, shape index: {}]
  %s14 = inlined_call_operand.vmem [shape: f32[1,128], index: 14, kind: input, shape index: {}]
  %s15 = inlined_call_operand.vmem [shape: f32[8,128], index: 15, kind: output, shape index: {}]
  %s16 = sld [smem:[#allocation0]]
  $region70: #{forward.1} parent=0
    _
  %s18 = ssub.s32 1, %s16
  %s19 = scalar_select 0, %s18, %s16
  // Predicated region
  $region2: #{forward.1} parent=0 // pred_check
    _
  $region3: #{forward.1} parent=0 // pred_check_branch
    %21 = sbr.rel (0) target = $region5
  $region4: #{forward.1} parent=0 // pred_region
    _
  $region5: #{forward.1} parent=0 // pred_fallthru
    _
  // Predicated region
  $region6: #{forward.1} parent=0 // pred_check
    _
  $region7: #{forward.1} parent=0 // pred_check_branch
    %23 = sbr.rel (0) target = $region9
  $region8: #{forward.1} parent=0 // pred_region
    _
  $region9: #{forward.1} parent=0 // pred_fallthru
    _
  // Predicated region
  $region10: #{forward.1} parent=0 // pred_check
    _
  $region11: #{forward.1} parent=0 // pred_check_branch
    %25 = sbr.rel (0) target = $region13
  $region12: #{forward.1} parent=0 // pred_region
    _
  $region13: #{forward.1} parent=0 // pred_fallthru
    _
  // Predicated region
  $region14: #{forward.1} parent=0 // pred_check
    _
  $region15: #{forward.1} parent=0 // pred_check_branch
    %27 = sbr.rel (0) target = $region17
  $region16: #{forward.1} parent=0 // pred_region
    _
  $region17: #{forward.1} parent=0 // pred_fallthru
    _
  // Predicated region
  $region18: #{forward.1} parent=0 // pred_check
    _
  $region19: #{forward.1} parent=0 // pred_check_branch
    %29 = sbr.rel (0) target = $region21
  $region20: #{forward.1} parent=0 // pred_region
    _
  $region21: #{forward.1} parent=0 // pred_fallthru
    _
  // Predicated region
  $region22: #{forward.1} parent=0 // pred_check
    _
  $region23: #{forward.1} parent=0 // pred_check_branch
    %31 = sbr.rel (0) target = $region25
  $region24: #{forward.1} parent=0 // pred_region
    _
  $region25: #{forward.1} parent=0 // pred_fallthru
    _
  // Predicated region
  $region26: #{forward.1} parent=0 // pred_check
    _
  $region27: #{forward.1} parent=0 // pred_check_branch
    %33 = sbr.rel (0) target = $region29
  $region28: #{forward.1} parent=0 // pred_region
    _
  $region29: #{forward.1} parent=0 // pred_fallthru
    _
  // Predicated region
  $region30: #{forward.1} parent=0 // pred_check
    _
  $region31: #{forward.1} parent=0 // pred_check_branch
    %35 = sbr.rel (0) target = $region33
  $region32: #{forward.1} parent=0 // pred_region
    _
  $region33: #{forward.1} parent=0 // pred_fallthru
    _
  // Predicated region
  $region34: #{forward.1} parent=0 // pred_check
    _
  $region35: #{forward.1} parent=0 // pred_check_branch
    %37 = sbr.rel (0) target = $region37
  $region36: #{forward.1} parent=0 // pred_region
    _
  $region37: #{forward.1} parent=0 // pred_fallthru
    _
  // Predicated region
  $region38: #{forward.1} parent=0 // pred_check
    _
  $region39: #{forward.1} parent=0 // pred_check_branch
    %39 = sbr.rel (0) target = $region41
  $region40: #{forward.1} parent=0 // pred_region
    _
  $region41: #{forward.1} parent=0 // pred_fallthru
    _
  // Predicated region
  $region42: #{forward.1} parent=0 // pred_check
    _
  $region43: #{forward.1} parent=0 // pred_check_branch
    %41 = sbr.rel (0) target = $region45
  $region44: #{forward.1} parent=0 // pred_region
    _
  $region45: #{forward.1} parent=0 // pred_fallthru
    _
  // Predicated region
  $region46: #{forward.1} parent=0 // pred_check
    _
  $region47: #{forward.1} parent=0 // pred_check_branch
    %43 = sbr.rel (0) target = $region49
  $region48: #{forward.1} parent=0 // pred_region
    _
  $region49: #{forward.1} parent=0 // pred_fallthru
    _
  // Predicated region
  $region50: #{forward.1} parent=0 // pred_check
    _
  $region51: #{forward.1} parent=0 // pred_check_branch
    %45 = sbr.rel (0) target = $region53
  $region52: #{forward.1} parent=0 // pred_region
    _
  $region53: #{forward.1} parent=0 // pred_fallthru
    _
  // Predicated region
  $region54: #{forward.1} parent=0 // pred_check
    _
  $region55: #{forward.1} parent=0 // pred_check_branch
    %47 = sbr.rel (0) target = $region57
  $region56: #{forward.1} parent=0 // pred_region
    _
  $region57: #{forward.1} parent=0 // pred_fallthru
    _
  // Predicated region
  $region58: #{forward.1} parent=0 // pred_check
    _
  $region59: #{forward.1} parent=0 // pred_check_branch
    %49 = sbr.rel (0) target = $region61
  $region60: #{forward.1} parent=0 // pred_region
    _
  $region61: #{forward.1} parent=0 // pred_fallthru
    _
  %v50 = vld [vmem:[%s0] sm:$0xff]
  %v51 = vld [vmem:[%s1] sm:$0xff]
  %v52 = vld [vmem:[%s1 + $0x8] sm:$0xff]
  %v53 = vld [vmem:[%s1 + $0x10] sm:$0xff]
  %v54 = vld [vmem:[%s1 + $0x18] sm:$0xff]
  %v55 = vld [vmem:[%s1 + $0x20] sm:$0xff]
  %v56 = vld [vmem:[%s1 + $0x28] sm:$0xff]
  %v57 = vld [vmem:[%s1 + $0x30] sm:$0xff]
  %v58 = vld [vmem:[%s1 + $0x38] sm:$0xff]
  %v59 = vld [vmem:[%s1 + $0x40] sm:$0xff]
  %v60 = vld [vmem:[%s1 + $0x48] sm:$0xff]
  %v61 = vld [vmem:[%s1 + $0x50] sm:$0xff]
  %v62 = vld [vmem:[%s1 + $0x58] sm:$0xff]
  %v63 = vld [vmem:[%s1 + $0x60] sm:$0xff]
  %v64 = vld [vmem:[%s1 + $0x68] sm:$0xff]
  %v65 = vld [vmem:[%s1 + $0x70] sm:$0xff]
  %v66 = vld [vmem:[%s1 + $0x78] sm:$0xff]
  %v67 = vld [vmem:[%s1 + $0x80] sm:$0xff]
  %v68 = vld [vmem:[%s1 + $0x88] sm:$0xff]
  %v69 = vld [vmem:[%s1 + $0x90] sm:$0xff]
  %v70 = vld [vmem:[%s1 + $0x98] sm:$0xff]
  %v71 = vld [vmem:[%s1 + $0xa0] sm:$0xff]
  %v72 = vld [vmem:[%s1 + $0xa8] sm:$0xff]
  %v73 = vld [vmem:[%s1 + $0xb0] sm:$0xff]
  %v74 = vld [vmem:[%s1 + $0xb8] sm:$0xff]
  %v75 = vld [vmem:[%s1 + $0xc0] sm:$0xff]
  %v76 = vld [vmem:[%s1 + $0xc8] sm:$0xff]
  %v77 = vld [vmem:[%s1 + $0xd0] sm:$0xff]
  %v78 = vld [vmem:[%s1 + $0xd8] sm:$0xff]
  %v79 = vld [vmem:[%s1 + $0xe0] sm:$0xff]
  %v80 = vld [vmem:[%s1 + $0xe8] sm:$0xff]
  %v81 = vld [vmem:[%s1 + $0xf0] sm:$0xff]
  %v82 = vld [vmem:[%s1 + $0xf8] sm:$0xff]
  %v83 = vld [vmem:[%s1 + $0x100] sm:$0xff]
  %v84 = vld [vmem:[%s1 + $0x108] sm:$0xff]
  %v85 = vld [vmem:[%s1 + $0x110] sm:$0xff]
  %v86 = vld [vmem:[%s1 + $0x118] sm:$0xff]
  %v87 = vld [vmem:[%s1 + $0x120] sm:$0xff]
  %v88 = vld [vmem:[%s1 + $0x128] sm:$0xff]
  %v89 = vld [vmem:[%s1 + $0x130] sm:$0xff]
  %v90 = vld [vmem:[%s1 + $0x138] sm:$0xff]
  %v91 = vld [vmem:[%s1 + $0x140] sm:$0xff]
  %v92 = vld [vmem:[%s1 + $0x148] sm:$0xff]
  %v93 = vld [vmem:[%s1 + $0x150] sm:$0xff]
  %v94 = vld [vmem:[%s1 + $0x158] sm:$0xff]
  %v95 = vld [vmem:[%s2] sm:$0xf]
  %v97 = vperm.slane %v95, 0
  %v98 = vperm.slane %v95, 1
  %v99 = vperm.slane %v95, 2
  %v100 = vperm.slane %v95, 3
  %vm105 = vcmask 719872
  %v107 = vsel %vm105, %v50, 0
  %109 = vmatpush.msra.mxu0 0.0
  %110 = vmatpush.msra.mxu0 0.0
  %111 = vmatpush.msra.mxu0 0.0
  %112 = vmatpush.msra.mxu0 0.0
  %113 = vmatpush.msra.mxu0 0.0
  %114 = vmatpush.msra.mxu0 %v91
  %115 = vmatpush.msra.mxu0 %v87
  %116 = vmatpush.msra.mxu0 %v83
  %117 = vmatpush.msra.mxu0 %v79
  %118 = vmatpush.msra.mxu0 %v75
  %119 = vmatpush.msra.mxu0 %v71
  %120 = vmatpush.msra.mxu0 %v67
  %121 = vmatpush.msra.mxu0 %v63
  %122 = vmatpush.msra.mxu0 %v59
  %123 = vmatpush.msra.mxu0 %v55
  %124 = vmatpush.msra.mxu0 %v51
  %125 = vmatmul.f32.gmra.mxu0 %v107
  %v126 = vpop.f32.mrf.mxu0
  %v127 = vadd.f32 %v97, %v126
  %128 = vdwg.mxu0
  %129 = vmatpush.msra.mxu0 0.0
  %130 = vmatpush.msra.mxu0 0.0
  %131 = vmatpush.msra.mxu0 0.0
  %132 = vmatpush.msra.mxu0 0.0
  %133 = vmatpush.msra.mxu0 0.0
  %134 = vmatpush.msra.mxu0 %v92
  %135 = vmatpush.msra.mxu0 %v88
  %136 = vmatpush.msra.mxu0 %v84
  %137 = vmatpush.msra.mxu0 %v80
  %138 = vmatpush.msra.mxu0 %v76
  %139 = vmatpush.msra.mxu0 %v72
  %140 = vmatpush.msra.mxu0 %v68
  %141 = vmatpush.msra.mxu0 %v64
  %142 = vmatpush.msra.mxu0 %v60
  %143 = vmatpush.msra.mxu0 %v56
  %144 = vmatpush.msra.mxu0 %v52
  %145 = vmatmul.f32.gmra.mxu0 %v107
  %v146 = vpop.f32.mrf.mxu0
  %v147 = vadd.f32 %v98, %v146
  %148 = vdwg.mxu0
  %149 = vmatpush.msra.mxu0 0.0
  %150 = vmatpush.msra.mxu0 0.0
  %151 = vmatpush.msra.mxu0 0.0
  %152 = vmatpush.msra.mxu0 0.0
  %153 = vmatpush.msra.mxu0 0.0
  %154 = vmatpush.msra.mxu0 %v93
  %155 = vmatpush.msra.mxu0 %v89
  %156 = vmatpush.msra.mxu0 %v85
  %157 = vmatpush.msra.mxu0 %v81
  %158 = vmatpush.msra.mxu0 %v77
  %159 = vmatpush.msra.mxu0 %v73
  %160 = vmatpush.msra.mxu0 %v69
  %161 = vmatpush.msra.mxu0 %v65
  %162 = vmatpush.msra.mxu0 %v61
  %163 = vmatpush.msra.mxu0 %v57
  %164 = vmatpush.msra.mxu0 %v53
  %165 = vmatmul.f32.gmra.mxu0 %v107
  %v166 = vpop.f32.mrf.mxu0
  %v167 = vadd.f32 %v99, %v166
  %168 = vdwg.mxu0
  %169 = vmatpush.msra.mxu0 0.0
  %170 = vmatpush.msra.mxu0 0.0
  %171 = vmatpush.msra.mxu0 0.0
  %172 = vmatpush.msra.mxu0 0.0
  %173 = vmatpush.msra.mxu0 0.0
  %174 = vmatpush.msra.mxu0 %v94
  %175 = vmatpush.msra.mxu0 %v90
  %176 = vmatpush.msra.mxu0 %v86
  %177 = vmatpush.msra.mxu0 %v82
  %178 = vmatpush.msra.mxu0 %v78
  %179 = vmatpush.msra.mxu0 %v74
  %180 = vmatpush.msra.mxu0 %v70
  %181 = vmatpush.msra.mxu0 %v66
  %182 = vmatpush.msra.mxu0 %v62
  %183 = vmatpush.msra.mxu0 %v58
  %184 = vmatpush.msra.mxu0 %v54
  %185 = vmatmul.f32.gmra.mxu0 %v107
  %v186 = vpop.f32.mrf.mxu0
  %v187 = vadd.f32 %v100, %v186
  %188 = vdwg.mxu0
  %v189 = vld [vmem:[%s3] sm:$0x3]
  %v191 = vperm.slane %v189, 0
  %v192 = vperm.slane %v189, 1
  %v195 = vmul.f32 %v167, %v191
  %v196 = vmul.f32 %v187, %v192
  %v197 = vld [vmem:[%s4] sm:$0x3]
  %v199 = vperm.slane %v197, 0
  %v200 = vperm.slane %v197, 1
  %v203 = vadd.f32 %v195, %v199
  %v204 = vadd.f32 %v196, %v200
  %v205 = vand.u32 2147483647, %v203
  %vm206 = vcmp.le.f32.partialorder %v205, 0.7853982
  %vm207 = vcmp.lt.s32.totalorder %v203, 0
  %v208 = vand.u32 %v203, 2139095040
  %v209 = vshrl.u32 %v208, 23
  %v210 = vsub.s32 %v209, 127
  %v211 = vand.u32 2147483647, %v203
  %v212 = vand.u32 %v211, 8388607
  %v213 = vor.u32 %v212, 8388608
  %v214 = vsub.s32 0, %v213
  %v215 = vadd.s32 %v210, 1
  %vm216 = vcmp.gt.s32.totalorder %v215, 0
  %v217 = vsel %vm216, %v215, 0
  %v218 = vshrl.u32 %v217, 5
  %v219 = vand.u32 %v217, 31
  %v220 = vsub.s32 32, %v219
  %v221 = vshrl.u32 683565275, %v220
  %v222 = vshll.u32 683565275, %v219
  %v223 = vshrl.u32 2475754826, %v220
  %v224 = vor.u32 %v222, %v223
  %v225 = vshll.u32 2475754826, %v219
  %v226 = vshrl.u32 2131351028, %v220
  %v227 = vor.u32 %v225, %v226
  %v228 = vshll.u32 2131351028, %v219
  %v229 = vshrl.u32 2102212464, %v220
  %v230 = vor.u32 %v228, %v229
  %v231 = vshll.u32 2102212464, %v219
  %v232 = vshrl.u32 920167782, %v220
  %v233 = vor.u32 %v231, %v232
  %v234 = vshll.u32 920167782, %v219
  %v235 = vshrl.u32 1326507024, %v220
  %v236 = vor.u32 %v234, %v235
  %vm237 = vcmp.lt.s32.totalorder %v218, 1
  %vm238 = vcmp.lt.s32.totalorder %v218, 2
  %vm239 = vcmp.lt.s32.totalorder %v218, 3
  %vm240 = vcmp.lt.s32.totalorder %v218, 4
  %v241 = vsel %vm237, %v221, %v224
  %v242 = vsel %vm240, %v230, 2102212464
  %v243 = vsel %vm239, %v227, %v242
  %v244 = vsel %vm238, %v241, %v243
  %v245 = vsel %vm237, %v224, %v227
  %v246 = vsel %vm240, %v233, 920167782
  %v247 = vsel %vm239, %v230, %v246
  %v248 = vsel %vm238, %v245, %v247
  %v249 = vsel %vm237, %v227, %v230
  %v250 = vsel %vm240, %v236, 1326507024
  %v251 = vsel %vm239, %v233, %v250
  %v252 = vsel %vm238, %v249, %v251
  %v253 = vshll.u32 %v213, 8
  %v254 = vand.u32 %v253, 65535
  %v255 = vshrl.u32 %v253, 16
  %v256 = vand.u32 %v252, 65535
  %v257 = vshrl.u32 %v252, 16
  %v258 = vmul.u32 %v254, %v256
  %v259 = vmul.u32 %v254, %v257
  %v260 = vmul.u32 %v255, %v256
  %v261 = vmul.u32 %v255, %v257
  %v262 = vshll.u32 %v259, 16
  %v263 = vshrl.u32 %v259, 16
  %v264 = vshll.u32 %v260, 16
  %v265 = vshrl.u32 %v260, 16
  %vm266 = vc.u32 %v258, %v262
  %v267 = vsel %vm266, 1, 0
  %v268 = vadd.s32 %v258, %v262
  %v269 = vadd.s32 %v261, %v267
  %vm270 = vc.u32 %v268, %v264
  %v271 = vsel %vm270, 1, 0
  %v272 = vadd.s32 %v268, %v264
  %v273 = vadd.s32 %v269, %v271
  %v274 = vadd.s32 %v273, %v263
  %v275 = vadd.s32 %v274, %v265
  %v276 = vand.u32 %v253, 65535
  %v277 = vshrl.u32 %v253, 16
  %v278 = vand.u32 %v248, 65535
  %v279 = vshrl.u32 %v248, 16
  %v280 = vmul.u32 %v276, %v278
  %v281 = vmul.u32 %v276, %v279
  %v282 = vmul.u32 %v277, %v278
  %v283 = vmul.u32 %v277, %v279
  %v284 = vshll.u32 %v281, 16
  %v285 = vshrl.u32 %v281, 16
  %v286 = vshll.u32 %v282, 16
  %v287 = vshrl.u32 %v282, 16
  %vm288 = vc.u32 %v280, %v284
  %v289 = vsel %vm288, 1, 0
  %v290 = vadd.s32 %v280, %v284
  %v291 = vadd.s32 %v283, %v289
  %vm292 = vc.u32 %v290, %v286
  %v293 = vsel %vm292, 1, 0
  %v294 = vadd.s32 %v290, %v286
  %v295 = vadd.s32 %v291, %v293
  %v296 = vadd.s32 %v295, %v285
  %v297 = vadd.s32 %v296, %v287
  %v298 = vmul.u32 %v253, %v244
  %v299 = vadd.s32 %v275, %v294
  %vm300 = vc.u32 %v275, %v294
  %v301 = vadd.s32 %v297, 1
  %v302 = vsel %vm300, %v301, %v297
  %v303 = vadd.s32 %v298, %v302
  %v304 = vadd.s32 %v303, 536870912
  %v305 = vshrl.u32 %v304, 30
  %v306 = vshll.u32 %v305, 30
  %v307 = vsub.s32 %v303, %v306
  %vm308 = vcmp.lt.s32.totalorder %v307, 0
  %v309 = vsub.s32 0, %v307
  %v310 = vsel %vm308, %v309, %v307
  %v311 = vclz %v310
  %v312 = vsub.s32 %v311, 2
  %vm313 = vcmp.gt.s32.totalorder 0, %v312
  %v314 = vsel %vm313, 0, %v312
  %v315 = vsub.s32 32, %v314
  %v316 = vshll.u32 %v307, %v314
  %v317 = vshrl.u32 %v299, %v315
  %v318 = vor.u32 %v316, %v317
  %v319 = vsub.s32 4294967266, %v314
  %v320 = vadd.s32 %v319, 127
  %v321 = vshll.u32 %v320, 23
  %v322 = vor.u32 4788187, %v321
  %v323 = vand.u32 2147483647, %v322
  %v325 = vcvt.s32.f32 %v318
  %v326 = vmul.f32 %v325, %v323
  %v327 = vxor.u32 %v326, 2147483648
  %v328 = vsel %vm207, %v327, %v326
  %v329 = vsub.s32 4, %v305
  %v330 = vsel %vm207, %v329, %v305
  %v331 = vsel %vm206, %v203, %v328
  %v332 = vsel %vm206, 0, %v330
  %v333 = vmul.f32 %v331, %v331
  %v334 = vmul.f32 %v333, -0.001358992
  %v335 = vadd.f32 %v334, 0.041655596
  %v336 = vmul.f32 %v333, %v335
  %v337 = vadd.f32 %v336, -0.4999988
  %v338 = vmul.f32 %v333, %v337
  %v339 = vadd.f32 1.0, %v338
  %v340 = vmul.f32 %v331, %v331
  %v341 = vmul.f32 %v340, -0.00019511016
  %v342 = vadd.f32 %v341, 0.008332121
  %v343 = vmul.f32 %v340, %v342
  %v344 = vadd.f32 %v343, -0.16666654
  %v345 = vmul.f32 %v340, %v344
  %v346 = vadd.f32 %v345, 1.0
  %v347 = vmul.f32 %v346, %v331
  %vm348 = vweird.f32 %v203
  %v349 = vadd.s32 %v332, 3
  %v350 = vand.u32 %v349, 3
  %vm351 = vcmp.lt.s32.totalorder %v350, 2
  %vm352 = vcmp.eq.s32.totalorder %v350, 0
  %v353 = vxor.u32 %v347, 2147483648
  %v354 = vsel %vm352, %v339, %v353
  %vm355 = vcmp.eq.s32.totalorder %v350, 2
  %v356 = vxor.u32 %v339, 2147483648
  %v357 = vsel %vm355, %v356, %v347
  %v358 = vsel %vm351, %v354, %v357
  %v359 = vsel %vm348, nan, %v358
  %v360 = vand.u32 2147483647, %v204
  %vm361 = vcmp.le.f32.partialorder %v360, 0.7853982
  %vm362 = vcmp.lt.s32.totalorder %v204, 0
  %v363 = vand.u32 %v204, 2139095040
  %v364 = vshrl.u32 %v363, 23
  %v365 = vsub.s32 %v364, 127
  %v366 = vand.u32 2147483647, %v204
  %v367 = vand.u32 %v366, 8388607
  %v368 = vor.u32 %v367, 8388608
  %v369 = vsub.s32 0, %v368
  %v370 = vadd.s32 %v365, 1
  %vm371 = vcmp.gt.s32.totalorder %v370, 0
  %v372 = vsel %vm371, %v370, 0
  %v373 = vshrl.u32 %v372, 5
  %v374 = vand.u32 %v372, 31
  %v375 = vsub.s32 32, %v374
  %v376 = vshrl.u32 683565275, %v375
  %v377 = vshll.u32 683565275, %v374
  %v378 = vshrl.u32 2475754826, %v375
  %v379 = vor.u32 %v377, %v378
  %v380 = vshll.u32 2475754826, %v374
  %v381 = vshrl.u32 2131351028, %v375
  %v382 = vor.u32 %v380, %v381
  %v383 = vshll.u32 2131351028, %v374
  %v384 = vshrl.u32 2102212464, %v375
  %v385 = vor.u32 %v383, %v384
  %v386 = vshll.u32 2102212464, %v374
  %v387 = vshrl.u32 920167782, %v375
  %v388 = vor.u32 %v386, %v387
  %v389 = vshll.u32 920167782, %v374
  %v390 = vshrl.u32 1326507024, %v375
  %v391 = vor.u32 %v389, %v390
  %vm392 = vcmp.lt.s32.totalorder %v373, 1
  %vm393 = vcmp.lt.s32.totalorder %v373, 2
  %vm394 = vcmp.lt.s32.totalorder %v373, 3
  %vm395 = vcmp.lt.s32.totalorder %v373, 4
  %v396 = vsel %vm392, %v376, %v379
  %v397 = vsel %vm395, %v385, 2102212464
  %v398 = vsel %vm394, %v382, %v397
  %v399 = vsel %vm393, %v396, %v398
  %v400 = vsel %vm392, %v379, %v382
  %v401 = vsel %vm395, %v388, 920167782
  %v402 = vsel %vm394, %v385, %v401
  %v403 = vsel %vm393, %v400, %v402
  %v404 = vsel %vm392, %v382, %v385
  %v405 = vsel %vm395, %v391, 1326507024
  %v406 = vsel %vm394, %v388, %v405
  %v407 = vsel %vm393, %v404, %v406
  %v408 = vshll.u32 %v368, 8
  %v409 = vand.u32 %v408, 65535
  %v410 = vshrl.u32 %v408, 16
  %v411 = vand.u32 %v407, 65535
  %v412 = vshrl.u32 %v407, 16
  %v413 = vmul.u32 %v409, %v411
  %v414 = vmul.u32 %v409, %v412
  %v415 = vmul.u32 %v410, %v411
  %v416 = vmul.u32 %v410, %v412
  %v417 = vshll.u32 %v414, 16
  %v418 = vshrl.u32 %v414, 16
  %v419 = vshll.u32 %v415, 16
  %v420 = vshrl.u32 %v415, 16
  %vm421 = vc.u32 %v413, %v417
  %v422 = vsel %vm421, 1, 0
  %v423 = vadd.s32 %v413, %v417
  %v424 = vadd.s32 %v416, %v422
  %vm425 = vc.u32 %v423, %v419
  %v426 = vsel %vm425, 1, 0
  %v427 = vadd.s32 %v423, %v419
  %v428 = vadd.s32 %v424, %v426
  %v429 = vadd.s32 %v428, %v418
  %v430 = vadd.s32 %v429, %v420
  %v431 = vand.u32 %v408, 65535
  %v432 = vshrl.u32 %v408, 16
  %v433 = vand.u32 %v403, 65535
  %v434 = vshrl.u32 %v403, 16
  %v435 = vmul.u32 %v431, %v433
  %v436 = vmul.u32 %v431, %v434
  %v437 = vmul.u32 %v432, %v433
  %v438 = vmul.u32 %v432, %v434
  %v439 = vshll.u32 %v436, 16
  %v440 = vshrl.u32 %v436, 16
  %v441 = vshll.u32 %v437, 16
  %v442 = vshrl.u32 %v437, 16
  %vm443 = vc.u32 %v435, %v439
  %v444 = vsel %vm443, 1, 0
  %v445 = vadd.s32 %v435, %v439
  %v446 = vadd.s32 %v438, %v444
  %vm447 = vc.u32 %v445, %v441
  %v448 = vsel %vm447, 1, 0
  %v449 = vadd.s32 %v445, %v441
  %v450 = vadd.s32 %v446, %v448
  %v451 = vadd.s32 %v450, %v440
  %v452 = vadd.s32 %v451, %v442
  %v453 = vmul.u32 %v408, %v399
  %v454 = vadd.s32 %v430, %v449
  %vm455 = vc.u32 %v430, %v449
  %v456 = vadd.s32 %v452, 1
  %v457 = vsel %vm455, %v456, %v452
  %v458 = vadd.s32 %v453, %v457
  %v459 = vadd.s32 %v458, 536870912
  %v460 = vshrl.u32 %v459, 30
  %v461 = vshll.u32 %v460, 30
  %v462 = vsub.s32 %v458, %v461
  %vm463 = vcmp.lt.s32.totalorder %v462, 0
  %v464 = vsub.s32 0, %v462
  %v465 = vsel %vm463, %v464, %v462
  %v466 = vclz %v465
  %v467 = vsub.s32 %v466, 2
  %vm468 = vcmp.gt.s32.totalorder 0, %v467
  %v469 = vsel %vm468, 0, %v467
  %v470 = vsub.s32 32, %v469
  %v471 = vshll.u32 %v462, %v469
  %v472 = vshrl.u32 %v454, %v470
  %v473 = vor.u32 %v471, %v472
  %v474 = vsub.s32 4294967266, %v469
  %v475 = vadd.s32 %v474, 127
  %v476 = vshll.u32 %v475, 23
  %v477 = vor.u32 4788187, %v476
  %v478 = vand.u32 2147483647, %v477
  %v480 = vcvt.s32.f32 %v473
  %v481 = vmul.f32 %v480, %v478
  %v482 = vxor.u32 %v481, 2147483648
  %v483 = vsel %vm362, %v482, %v481
  %v484 = vsub.s32 4, %v460
  %v485 = vsel %vm362, %v484, %v460
  %v486 = vsel %vm361, %v204, %v483
  %v487 = vsel %vm361, 0, %v485
  %v488 = vmul.f32 %v486, %v486
  %v489 = vmul.f32 %v488, -0.001358992
  %v490 = vadd.f32 %v489, 0.041655596
  %v491 = vmul.f32 %v488, %v490
  %v492 = vadd.f32 %v491, -0.4999988
  %v493 = vmul.f32 %v488, %v492
  %v494 = vadd.f32 1.0, %v493
  %v495 = vmul.f32 %v486, %v486
  %v496 = vmul.f32 %v495, -0.00019511016
  %v497 = vadd.f32 %v496, 0.008332121
  %v498 = vmul.f32 %v495, %v497
  %v499 = vadd.f32 %v498, -0.16666654
  %v500 = vmul.f32 %v495, %v499
  %v501 = vadd.f32 %v500, 1.0
  %v502 = vmul.f32 %v501, %v486
  %vm503 = vweird.f32 %v204
  %v504 = vadd.s32 %v487, 3
  %v505 = vand.u32 %v504, 3
  %vm506 = vcmp.lt.s32.totalorder %v505, 2
  %vm507 = vcmp.eq.s32.totalorder %v505, 0
  %v508 = vxor.u32 %v502, 2147483648
  %v509 = vsel %vm507, %v494, %v508
  %vm510 = vcmp.eq.s32.totalorder %v505, 2
  %v511 = vxor.u32 %v494, 2147483648
  %v512 = vsel %vm510, %v511, %v502
  %v513 = vsel %vm506, %v509, %v512
  %v514 = vsel %vm503, nan, %v513
  %v515 = vadd.f32 %v127, %v359
  %v516 = vadd.f32 %v147, %v514
  %v517 = vld [vmem:[%s5] sm:$0xff]
  %v518 = vld [vmem:[%s5 + $0x8] sm:$0xff]
  %v519 = vld [vmem:[%s5 + $0x10] sm:$0xff]
  %v520 = vld [vmem:[%s5 + $0x18] sm:$0xff]
  %v521 = vld [vmem:[%s5 + $0x20] sm:$0xff]
  %v522 = vld [vmem:[%s5 + $0x28] sm:$0xff]
  %v523 = vld [vmem:[%s5 + $0x30] sm:$0xff]
  %v524 = vld [vmem:[%s5 + $0x38] sm:$0xff]
  %v525 = vld [vmem:[%s5 + $0x40] sm:$0xff]
  %v526 = vld [vmem:[%s5 + $0x48] sm:$0xff]
  %v527 = vld [vmem:[%s5 + $0x50] sm:$0xff]
  %v528 = vld [vmem:[%s5 + $0x58] sm:$0xff]
  %v529 = vld [vmem:[%s5 + $0x60] sm:$0xff]
  %v530 = vld [vmem:[%s5 + $0x68] sm:$0xff]
  %v531 = vld [vmem:[%s5 + $0x70] sm:$0xff]
  %v532 = vld [vmem:[%s5 + $0x78] sm:$0xff]
  %v533 = vld [vmem:[%s5 + $0x80] sm:$0xff]
  %v534 = vld [vmem:[%s5 + $0x88] sm:$0xff]
  %v535 = vld [vmem:[%s5 + $0x90] sm:$0xff]
  %v536 = vld [vmem:[%s5 + $0x98] sm:$0xff]
  %v537 = vld [vmem:[%s5 + $0xa0] sm:$0xff]
  %v538 = vld [vmem:[%s5 + $0xa8] sm:$0xff]
  %v539 = vld [vmem:[%s5 + $0xb0] sm:$0xff]
  %v540 = vld [vmem:[%s5 + $0xb8] sm:$0xff]
  %v541 = vld [vmem:[%s5 + $0xc0] sm:$0xff]
  %v542 = vld [vmem:[%s5 + $0xc8] sm:$0xff]
  %v543 = vld [vmem:[%s5 + $0xd0] sm:$0xff]
  %v544 = vld [vmem:[%s5 + $0xd8] sm:$0xff]
  %v545 = vld [vmem:[%s5 + $0xe0] sm:$0xff]
  %v546 = vld [vmem:[%s5 + $0xe8] sm:$0xff]
  %v547 = vld [vmem:[%s5 + $0xf0] sm:$0xff]
  %v548 = vld [vmem:[%s5 + $0xf8] sm:$0xff]
  %v549 = vld [vmem:[%s5 + $0x100] sm:$0xff]
  %v550 = vld [vmem:[%s5 + $0x108] sm:$0xff]
  %v551 = vld [vmem:[%s5 + $0x110] sm:$0xff]
  %v552 = vld [vmem:[%s5 + $0x118] sm:$0xff]
  %v553 = vld [vmem:[%s5 + $0x120] sm:$0xff]
  %v554 = vld [vmem:[%s5 + $0x128] sm:$0xff]
  %v555 = vld [vmem:[%s5 + $0x130] sm:$0xff]
  %v556 = vld [vmem:[%s5 + $0x138] sm:$0xff]
  %v557 = vld [vmem:[%s5 + $0x140] sm:$0xff]
  %v558 = vld [vmem:[%s5 + $0x148] sm:$0xff]
  %v559 = vld [vmem:[%s5 + $0x150] sm:$0xff]
  %v560 = vld [vmem:[%s5 + $0x158] sm:$0xff]
  %v561 = vld [vmem:[%s5 + $0x160] sm:$0xff]
  %v562 = vld [vmem:[%s5 + $0x168] sm:$0xff]
  %v563 = vld [vmem:[%s5 + $0x170] sm:$0xff]
  %v564 = vld [vmem:[%s5 + $0x178] sm:$0xff]
  %v565 = vld [vmem:[%s5 + $0x180] sm:$0xff]
  %v566 = vld [vmem:[%s5 + $0x188] sm:$0xff]
  %v567 = vld [vmem:[%s5 + $0x190] sm:$0xff]
  %v568 = vld [vmem:[%s5 + $0x198] sm:$0xff]
  %v569 = vld [vmem:[%s5 + $0x1a0] sm:$0xff]
  %v570 = vld [vmem:[%s5 + $0x1a8] sm:$0xff]
  %v571 = vld [vmem:[%s5 + $0x1b0] sm:$0xff]
  %v572 = vld [vmem:[%s5 + $0x1b8] sm:$0xff]
  %v573 = vld [vmem:[%s5 + $0x1c0] sm:$0xff]
  %v574 = vld [vmem:[%s5 + $0x1c8] sm:$0xff]
  %v575 = vld [vmem:[%s5 + $0x1d0] sm:$0xff]
  %v576 = vld [vmem:[%s5 + $0x1d8] sm:$0xff]
  %v577 = vld [vmem:[%s5 + $0x1e0] sm:$0xff]
  %v578 = vld [vmem:[%s5 + $0x1e8] sm:$0xff]
  %v579 = vld [vmem:[%s5 + $0x1f0] sm:$0xff]
  %v580 = vld [vmem:[%s5 + $0x1f8] sm:$0xff]
  %v581 = vld [vmem:[%s5 + $0x200] sm:$0xff]
  %v582 = vld [vmem:[%s5 + $0x208] sm:$0xff]
  %v583 = vld [vmem:[%s5 + $0x210] sm:$0xff]
  %v584 = vld [vmem:[%s5 + $0x218] sm:$0xff]
  %v585 = vld [vmem:[%s5 + $0x220] sm:$0xff]
  %v586 = vld [vmem:[%s5 + $0x228] sm:$0xff]
  %v587 = vld [vmem:[%s5 + $0x230] sm:$0xff]
  %v588 = vld [vmem:[%s5 + $0x238] sm:$0xff]
  %v589 = vld [vmem:[%s5 + $0x240] sm:$0xff]
  %v590 = vld [vmem:[%s5 + $0x248] sm:$0xff]
  %v591 = vld [vmem:[%s5 + $0x250] sm:$0xff]
  %v592 = vld [vmem:[%s5 + $0x258] sm:$0xff]
  %v593 = vld [vmem:[%s5 + $0x260] sm:$0xff]
  %v594 = vld [vmem:[%s5 + $0x268] sm:$0xff]
  %v595 = vld [vmem:[%s5 + $0x270] sm:$0xff]
  %v596 = vld [vmem:[%s5 + $0x278] sm:$0xff]
  %v597 = vld [vmem:[%s5 + $0x280] sm:$0xff]
  %v598 = vld [vmem:[%s5 + $0x288] sm:$0xff]
  %v599 = vld [vmem:[%s5 + $0x290] sm:$0xff]
  %v600 = vld [vmem:[%s5 + $0x298] sm:$0xff]
  %v601 = vld [vmem:[%s5 + $0x2a0] sm:$0xff]
  %v602 = vld [vmem:[%s5 + $0x2a8] sm:$0xff]
  %v603 = vld [vmem:[%s5 + $0x2b0] sm:$0xff]
  %v604 = vld [vmem:[%s5 + $0x2b8] sm:$0xff]
  %v605 = vld [vmem:[%s5 + $0x2c0] sm:$0xff]
  %v606 = vld [vmem:[%s5 + $0x2c8] sm:$0xff]
  %v607 = vld [vmem:[%s5 + $0x2d0] sm:$0xff]
  %v608 = vld [vmem:[%s5 + $0x2d8] sm:$0xff]
  %v609 = vld [vmem:[%s5 + $0x2e0] sm:$0xff]
  %v610 = vld [vmem:[%s5 + $0x2e8] sm:$0xff]
  %v611 = vld [vmem:[%s5 + $0x2f0] sm:$0xff]
  %v612 = vld [vmem:[%s5 + $0x2f8] sm:$0xff]
  %v613 = vld [vmem:[%s5 + $0x300] sm:$0xff]
  %v614 = vld [vmem:[%s5 + $0x308] sm:$0xff]
  %v615 = vld [vmem:[%s5 + $0x310] sm:$0xff]
  %v616 = vld [vmem:[%s5 + $0x318] sm:$0xff]
  %v617 = vld [vmem:[%s5 + $0x320] sm:$0xff]
  %v618 = vld [vmem:[%s5 + $0x328] sm:$0xff]
  %v619 = vld [vmem:[%s5 + $0x330] sm:$0xff]
  %v620 = vld [vmem:[%s5 + $0x338] sm:$0xff]
  %v621 = vld [vmem:[%s5 + $0x340] sm:$0xff]
  %v622 = vld [vmem:[%s5 + $0x348] sm:$0xff]
  %v623 = vld [vmem:[%s5 + $0x350] sm:$0xff]
  %v624 = vld [vmem:[%s5 + $0x358] sm:$0xff]
  %v625 = vld [vmem:[%s5 + $0x360] sm:$0xff]
  %v626 = vld [vmem:[%s5 + $0x368] sm:$0xff]
  %v627 = vld [vmem:[%s5 + $0x370] sm:$0xff]
  %v628 = vld [vmem:[%s5 + $0x378] sm:$0xff]
  %v629 = vld [vmem:[%s5 + $0x380] sm:$0xff]
  %v630 = vld [vmem:[%s5 + $0x388] sm:$0xff]
  %v631 = vld [vmem:[%s5 + $0x390] sm:$0xff]
  %v632 = vld [vmem:[%s5 + $0x398] sm:$0xff]
  %v633 = vld [vmem:[%s5 + $0x3a0] sm:$0xff]
  %v634 = vld [vmem:[%s5 + $0x3a8] sm:$0xff]
  %v635 = vld [vmem:[%s5 + $0x3b0] sm:$0xff]
  %v636 = vld [vmem:[%s5 + $0x3b8] sm:$0xff]
  %v637 = vld [vmem:[%s5 + $0x3c0] sm:$0xff]
  %v638 = vld [vmem:[%s5 + $0x3c8] sm:$0xff]
  %v639 = vld [vmem:[%s5 + $0x3d0] sm:$0xff]
  %v640 = vld [vmem:[%s5 + $0x3d8] sm:$0xff]
  %v641 = vld [vmem:[%s5 + $0x3e0] sm:$0xff]
  %v642 = vld [vmem:[%s5 + $0x3e8] sm:$0xff]
  %v643 = vld [vmem:[%s5 + $0x3f0] sm:$0xff]
  %v644 = vld [vmem:[%s5 + $0x3f8] sm:$0xff]
  %v645 = vld [vmem:[%s5 + $0x400] sm:$0xff]
  %v646 = vld [vmem:[%s5 + $0x408] sm:$0xff]
  %v647 = vld [vmem:[%s5 + $0x410] sm:$0xff]
  %v648 = vld [vmem:[%s5 + $0x418] sm:$0xff]
  %v649 = vld [vmem:[%s5 + $0x420] sm:$0xff]
  %v650 = vld [vmem:[%s5 + $0x428] sm:$0xff]
  %v651 = vld [vmem:[%s5 + $0x430] sm:$0xff]
  %v652 = vld [vmem:[%s5 + $0x438] sm:$0xff]
  %v653 = vld [vmem:[%s5 + $0x440] sm:$0xff]
  %v654 = vld [vmem:[%s5 + $0x448] sm:$0xff]
  %v655 = vld [vmem:[%s5 + $0x450] sm:$0xff]
  %v656 = vld [vmem:[%s5 + $0x458] sm:$0xff]
  %v657 = vld [vmem:[%s5 + $0x460] sm:$0xff]
  %v658 = vld [vmem:[%s5 + $0x468] sm:$0xff]
  %v659 = vld [vmem:[%s5 + $0x470] sm:$0xff]
  %v660 = vld [vmem:[%s5 + $0x478] sm:$0xff]
  %v661 = vld [vmem:[%s5 + $0x480] sm:$0xff]
  %v662 = vld [vmem:[%s5 + $0x488] sm:$0xff]
  %v663 = vld [vmem:[%s5 + $0x490] sm:$0xff]
  %v664 = vld [vmem:[%s5 + $0x498] sm:$0xff]
  %v665 = vld [vmem:[%s5 + $0x4a0] sm:$0xff]
  %v666 = vld [vmem:[%s5 + $0x4a8] sm:$0xff]
  %v667 = vld [vmem:[%s5 + $0x4b0] sm:$0xff]
  %v668 = vld [vmem:[%s5 + $0x4b8] sm:$0xff]
  %v669 = vld [vmem:[%s5 + $0x4c0] sm:$0xff]
  %v670 = vld [vmem:[%s5 + $0x4c8] sm:$0xff]
  %v671 = vld [vmem:[%s5 + $0x4d0] sm:$0xff]
  %v672 = vld [vmem:[%s5 + $0x4d8] sm:$0xff]
  %v673 = vld [vmem:[%s5 + $0x4e0] sm:$0xff]
  %v674 = vld [vmem:[%s5 + $0x4e8] sm:$0xff]
  %v675 = vld [vmem:[%s5 + $0x4f0] sm:$0xff]
  %v676 = vld [vmem:[%s5 + $0x4f8] sm:$0xff]
  %v677 = vld [vmem:[%s5 + $0x500] sm:$0xff]
  %v678 = vld [vmem:[%s5 + $0x508] sm:$0xff]
  %v679 = vld [vmem:[%s5 + $0x510] sm:$0xff]
  %v680 = vld [vmem:[%s5 + $0x518] sm:$0xff]
  %v681 = vld [vmem:[%s5 + $0x520] sm:$0xff]
  %v682 = vld [vmem:[%s5 + $0x528] sm:$0xff]
  %v683 = vld [vmem:[%s5 + $0x530] sm:$0xff]
  %v684 = vld [vmem:[%s5 + $0x538] sm:$0xff]
  %v685 = vld [vmem:[%s5 + $0x540] sm:$0xff]
  %v686 = vld [vmem:[%s5 + $0x548] sm:$0xff]
  %v687 = vld [vmem:[%s5 + $0x550] sm:$0xff]
  %v688 = vld [vmem:[%s5 + $0x558] sm:$0xff]
  %v689 = vld [vmem:[%s5 + $0x560] sm:$0xff]
  %v690 = vld [vmem:[%s5 + $0x568] sm:$0xff]
  %v691 = vld [vmem:[%s5 + $0x570] sm:$0xff]
  %v692 = vld [vmem:[%s5 + $0x578] sm:$0xff]
  %v693 = vld [vmem:[%s5 + $0x580] sm:$0xff]
  %v694 = vld [vmem:[%s5 + $0x588] sm:$0xff]
  %v695 = vld [vmem:[%s5 + $0x590] sm:$0xff]
  %v696 = vld [vmem:[%s5 + $0x598] sm:$0xff]
  %v697 = vld [vmem:[%s5 + $0x5a0] sm:$0xff]
  %v698 = vld [vmem:[%s5 + $0x5a8] sm:$0xff]
  %v699 = vld [vmem:[%s5 + $0x5b0] sm:$0xff]
  %v700 = vld [vmem:[%s5 + $0x5b8] sm:$0xff]
  %v701 = vld [vmem:[%s5 + $0x5c0] sm:$0xff]
  %v702 = vld [vmem:[%s5 + $0x5c8] sm:$0xff]
  %v703 = vld [vmem:[%s5 + $0x5d0] sm:$0xff]
  %v704 = vld [vmem:[%s5 + $0x5d8] sm:$0xff]
  %v705 = vld [vmem:[%s5 + $0x5e0] sm:$0xff]
  %v706 = vld [vmem:[%s5 + $0x5e8] sm:$0xff]
  %v707 = vld [vmem:[%s5 + $0x5f0] sm:$0xff]
  %v708 = vld [vmem:[%s5 + $0x5f8] sm:$0xff]
  %709 = vmatpush.msra.mxu0 %v607
  %710 = vmatpush.msra.mxu0 %v601
  %711 = vmatpush.msra.mxu0 %v595
  %712 = vmatpush.msra.mxu0 %v589
  %713 = vmatpush.msra.mxu0 %v583
  %714 = vmatpush.msra.mxu0 %v577
  %715 = vmatpush.msra.mxu0 %v571
  %716 = vmatpush.msra.mxu0 %v565
  %717 = vmatpush.msra.mxu0 %v559
  %718 = vmatpush.msra.mxu0 %v553
  %719 = vmatpush.msra.mxu0 %v547
  %720 = vmatpush.msra.mxu0 %v541
  %721 = vmatpush.msra.mxu0 %v535
  %722 = vmatpush.msra.mxu0 %v529
  %723 = vmatpush.msra.mxu0 %v523
  %724 = vmatpush.msra.mxu0 %v517
  %725 = vmatmul.f32.gmra.mxu0 %v515
  %v726 = vpop.f32.mrf.mxu0
  %v727 = vadd.f32 0.0, %v726
  %728 = vdwg.mxu0
  %729 = vmatpush.msra.mxu0 %v703
  %730 = vmatpush.msra.mxu0 %v697
  %731 = vmatpush.msra.mxu0 %v691
  %732 = vmatpush.msra.mxu0 %v685
  %733 = vmatpush.msra.mxu0 %v679
  %734 = vmatpush.msra.mxu0 %v673
  %735 = vmatpush.msra.mxu0 %v667
  %736 = vmatpush.msra.mxu0 %v661
  %737 = vmatpush.msra.mxu0 %v655
  %738 = vmatpush.msra.mxu0 %v649
  %739 = vmatpush.msra.mxu0 %v643
  %740 = vmatpush.msra.mxu0 %v637
  %741 = vmatpush.msra.mxu0 %v631
  %742 = vmatpush.msra.mxu0 %v625
  %743 = vmatpush.msra.mxu0 %v619
  %744 = vmatpush.msra.mxu0 %v613
  %745 = vmatmul.f32.gmra.mxu0 %v516
  %v746 = vpop.f32.mrf.mxu0
  %v747 = vadd.f32 %v727, %v746
  %748 = vdwg.mxu0
  %749 = vmatpush.msra.mxu0 %v608
  %750 = vmatpush.msra.mxu0 %v602
  %751 = vmatpush.msra.mxu0 %v596
  %752 = vmatpush.msra.mxu0 %v590
  %753 = vmatpush.msra.mxu0 %v584
  %754 = vmatpush.msra.mxu0 %v578
  %755 = vmatpush.msra.mxu0 %v572
  %756 = vmatpush.msra.mxu0 %v566
  %757 = vmatpush.msra.mxu0 %v560
  %758 = vmatpush.msra.mxu0 %v554
  %759 = vmatpush.msra.mxu0 %v548
  %760 = vmatpush.msra.mxu0 %v542
  %761 = vmatpush.msra.mxu0 %v536
  %762 = vmatpush.msra.mxu0 %v530
  %763 = vmatpush.msra.mxu0 %v524
  %764 = vmatpush.msra.mxu0 %v518
  %765 = vmatmul.f32.gmra.mxu0 %v515
  %v766 = vpop.f32.mrf.mxu0
  %v767 = vadd.f32 0.0, %v766
  %768 = vdwg.mxu0
  %769 = vmatpush.msra.mxu0 %v704
  %770 = vmatpush.msra.mxu0 %v698
  %771 = vmatpush.msra.mxu0 %v692
  %772 = vmatpush.msra.mxu0 %v686
  %773 = vmatpush.msra.mxu0 %v680
  %774 = vmatpush.msra.mxu0 %v674
  %775 = vmatpush.msra.mxu0 %v668
  %776 = vmatpush.msra.mxu0 %v662
  %777 = vmatpush.msra.mxu0 %v656
  %778 = vmatpush.msra.mxu0 %v650
  %779 = vmatpush.msra.mxu0 %v644
  %780 = vmatpush.msra.mxu0 %v638
  %781 = vmatpush.msra.mxu0 %v632
  %782 = vmatpush.msra.mxu0 %v626
  %783 = vmatpush.msra.mxu0 %v620
  %784 = vmatpush.msra.mxu0 %v614
  %785 = vmatmul.f32.gmra.mxu0 %v516
  %v786 = vpop.f32.mrf.mxu0
  %v787 = vadd.f32 %v767, %v786
  %788 = vdwg.mxu0
  %789 = vmatpush.msra.mxu0 %v609
  %790 = vmatpush.msra.mxu0 %v603
  %791 = vmatpush.msra.mxu0 %v597
  %792 = vmatpush.msra.mxu0 %v591
  %793 = vmatpush.msra.mxu0 %v585
  %794 = vmatpush.msra.mxu0 %v579
  %795 = vmatpush.msra.mxu0 %v573
  %796 = vmatpush.msra.mxu0 %v567
  %797 = vmatpush.msra.mxu0 %v561
  %798 = vmatpush.msra.mxu0 %v555
  %799 = vmatpush.msra.mxu0 %v549
  %800 = vmatpush.msra.mxu0 %v543
  %801 = vmatpush.msra.mxu0 %v537
  %802 = vmatpush.msra.mxu0 %v531
  %803 = vmatpush.msra.mxu0 %v525
  %804 = vmatpush.msra.mxu0 %v519
  %805 = vmatmul.f32.gmra.mxu0 %v515
  %v806 = vpop.f32.mrf.mxu0
  %v807 = vadd.f32 0.0, %v806
  %808 = vdwg.mxu0
  %809 = vmatpush.msra.mxu0 %v705
  %810 = vmatpush.msra.mxu0 %v699
  %811 = vmatpush.msra.mxu0 %v693
  %812 = vmatpush.msra.mxu0 %v687
  %813 = vmatpush.msra.mxu0 %v681
  %814 = vmatpush.msra.mxu0 %v675
  %815 = vmatpush.msra.mxu0 %v669
  %816 = vmatpush.msra.mxu0 %v663
  %817 = vmatpush.msra.mxu0 %v657
  %818 = vmatpush.msra.mxu0 %v651
  %819 = vmatpush.msra.mxu0 %v645
  %820 = vmatpush.msra.mxu0 %v639
  %821 = vmatpush.msra.mxu0 %v633
  %822 = vmatpush.msra.mxu0 %v627
  %823 = vmatpush.msra.mxu0 %v621
  %824 = vmatpush.msra.mxu0 %v615
  %825 = vmatmul.f32.gmra.mxu0 %v516
  %v826 = vpop.f32.mrf.mxu0
  %v827 = vadd.f32 %v807, %v826
  %828 = vdwg.mxu0
  %829 = vmatpush.msra.mxu0 %v610
  %830 = vmatpush.msra.mxu0 %v604
  %831 = vmatpush.msra.mxu0 %v598
  %832 = vmatpush.msra.mxu0 %v592
  %833 = vmatpush.msra.mxu0 %v586
  %834 = vmatpush.msra.mxu0 %v580
  %835 = vmatpush.msra.mxu0 %v574
  %836 = vmatpush.msra.mxu0 %v568
  %837 = vmatpush.msra.mxu0 %v562
  %838 = vmatpush.msra.mxu0 %v556
  %839 = vmatpush.msra.mxu0 %v550
  %840 = vmatpush.msra.mxu0 %v544
  %841 = vmatpush.msra.mxu0 %v538
  %842 = vmatpush.msra.mxu0 %v532
  %843 = vmatpush.msra.mxu0 %v526
  %844 = vmatpush.msra.mxu0 %v520
  %845 = vmatmul.f32.gmra.mxu0 %v515
  %v846 = vpop.f32.mrf.mxu0
  %v847 = vadd.f32 0.0, %v846
  %848 = vdwg.mxu0
  %849 = vmatpush.msra.mxu0 %v706
  %850 = vmatpush.msra.mxu0 %v700
  %851 = vmatpush.msra.mxu0 %v694
  %852 = vmatpush.msra.mxu0 %v688
  %853 = vmatpush.msra.mxu0 %v682
  %854 = vmatpush.msra.mxu0 %v676
  %855 = vmatpush.msra.mxu0 %v670
  %856 = vmatpush.msra.mxu0 %v664
  %857 = vmatpush.msra.mxu0 %v658
  %858 = vmatpush.msra.mxu0 %v652
  %859 = vmatpush.msra.mxu0 %v646
  %860 = vmatpush.msra.mxu0 %v640
  %861 = vmatpush.msra.mxu0 %v634
  %862 = vmatpush.msra.mxu0 %v628
  %863 = vmatpush.msra.mxu0 %v622
  %864 = vmatpush.msra.mxu0 %v616
  %865 = vmatmul.f32.gmra.mxu0 %v516
  %v866 = vpop.f32.mrf.mxu0
  %v867 = vadd.f32 %v847, %v866
  %868 = vdwg.mxu0
  %869 = vmatpush.msra.mxu0 %v611
  %870 = vmatpush.msra.mxu0 %v605
  %871 = vmatpush.msra.mxu0 %v599
  %872 = vmatpush.msra.mxu0 %v593
  %873 = vmatpush.msra.mxu0 %v587
  %874 = vmatpush.msra.mxu0 %v581
  %875 = vmatpush.msra.mxu0 %v575
  %876 = vmatpush.msra.mxu0 %v569
  %877 = vmatpush.msra.mxu0 %v563
  %878 = vmatpush.msra.mxu0 %v557
  %879 = vmatpush.msra.mxu0 %v551
  %880 = vmatpush.msra.mxu0 %v545
  %881 = vmatpush.msra.mxu0 %v539
  %882 = vmatpush.msra.mxu0 %v533
  %883 = vmatpush.msra.mxu0 %v527
  %884 = vmatpush.msra.mxu0 %v521
  %885 = vmatmul.f32.gmra.mxu0 %v515
  %v886 = vpop.f32.mrf.mxu0
  %v887 = vadd.f32 0.0, %v886
  %888 = vdwg.mxu0
  %889 = vmatpush.msra.mxu0 %v707
  %890 = vmatpush.msra.mxu0 %v701
  %891 = vmatpush.msra.mxu0 %v695
  %892 = vmatpush.msra.mxu0 %v689
  %893 = vmatpush.msra.mxu0 %v683
  %894 = vmatpush.msra.mxu0 %v677
  %895 = vmatpush.msra.mxu0 %v671
  %896 = vmatpush.msra.mxu0 %v665
  %897 = vmatpush.msra.mxu0 %v659
  %898 = vmatpush.msra.mxu0 %v653
  %899 = vmatpush.msra.mxu0 %v647
  %900 = vmatpush.msra.mxu0 %v641
  %901 = vmatpush.msra.mxu0 %v635
  %902 = vmatpush.msra.mxu0 %v629
  %903 = vmatpush.msra.mxu0 %v623
  %904 = vmatpush.msra.mxu0 %v617
  %905 = vmatmul.f32.gmra.mxu0 %v516
  %v906 = vpop.f32.mrf.mxu0
  %v907 = vadd.f32 %v887, %v906
  %908 = vdwg.mxu0
  %909 = vmatpush.msra.mxu0 %v612
  %910 = vmatpush.msra.mxu0 %v606
  %911 = vmatpush.msra.mxu0 %v600
  %912 = vmatpush.msra.mxu0 %v594
  %913 = vmatpush.msra.mxu0 %v588
  %914 = vmatpush.msra.mxu0 %v582
  %915 = vmatpush.msra.mxu0 %v576
  %916 = vmatpush.msra.mxu0 %v570
  %917 = vmatpush.msra.mxu0 %v564
  %918 = vmatpush.msra.mxu0 %v558
  %919 = vmatpush.msra.mxu0 %v552
  %920 = vmatpush.msra.mxu0 %v546
  %921 = vmatpush.msra.mxu0 %v540
  %922 = vmatpush.msra.mxu0 %v534
  %923 = vmatpush.msra.mxu0 %v528
  %924 = vmatpush.msra.mxu0 %v522
  %925 = vmatmul.f32.gmra.mxu0 %v515
  %v926 = vpop.f32.mrf.mxu0
  %v927 = vadd.f32 0.0, %v926
  %928 = vdwg.mxu0
  %929 = vmatpush.msra.mxu0 %v708
  %930 = vmatpush.msra.mxu0 %v702
  %931 = vmatpush.msra.mxu0 %v696
  %932 = vmatpush.msra.mxu0 %v690
  %933 = vmatpush.msra.mxu0 %v684
  %934 = vmatpush.msra.mxu0 %v678
  %935 = vmatpush.msra.mxu0 %v672
  %936 = vmatpush.msra.mxu0 %v666
  %937 = vmatpush.msra.mxu0 %v660
  %938 = vmatpush.msra.mxu0 %v654
  %939 = vmatpush.msra.mxu0 %v648
  %940 = vmatpush.msra.mxu0 %v642
  %941 = vmatpush.msra.mxu0 %v636
  %942 = vmatpush.msra.mxu0 %v630
  %943 = vmatpush.msra.mxu0 %v624
  %944 = vmatpush.msra.mxu0 %v618
  %945 = vmatmul.f32.gmra.mxu0 %v516
  %v946 = vpop.f32.mrf.mxu0
  %v947 = vadd.f32 %v927, %v946
  %948 = vdwg.mxu0
  %v949 = vmul.f32 %v747, %v827
  %v950 = vmul.f32 %v787, %v867
  %951 = vrot.lane.b32.xlu0 %v827, 32
  %v952 = vpop.permute.xlu0 %951
  %953 = vrot.lane.b32.xlu0 %v867, 32
  %v954 = vpop.permute.xlu0 %953
  %v955 = vlaneseq
  %v956 = vand.u32 %v955, 127
  %vm957 = vcmp.lt.s32.totalorder %v956, 32
  %v958 = vsel %vm957, %v952, %v954
  %v959 = vsel %vm957, %v954, %v952
  %v960 = vmul.f32 %v747, %v959
  %v961 = vmul.f32 %v787, %v958
  %962 = vrot.lane.b32.xlu0 %v827, 64
  %v963 = vpop.permute.xlu0 %962
  %964 = vrot.lane.b32.xlu0 %v867, 64
  %v965 = vpop.permute.xlu0 %964
  %vm966 = vcmp.lt.s32.totalorder %v956, 64
  %v967 = vsel %vm966, %v963, %v965
  %v968 = vsel %vm966, %v965, %v963
  %v969 = vmul.f32 %v747, %v968
  %v970 = vmul.f32 %v787, %v967
  %971 = vrot.lane.b32.xlu0 %v827, 96
  %v972 = vpop.permute.xlu0 %971
  %973 = vrot.lane.b32.xlu0 %v867, 96
  %v974 = vpop.permute.xlu0 %973
  %vm975 = vcmp.lt.s32.totalorder %v956, 96
  %v976 = vsel %vm975, %v972, %v974
  %v977 = vsel %vm975, %v974, %v972
  %v978 = vmul.f32 %v747, %v977
  %v979 = vmul.f32 %v787, %v976
  %v980 = vmul.f32 %v747, %v867
  %v981 = vmul.f32 %v787, %v827
  %v982 = vmul.f32 %v747, %v958
  %v983 = vmul.f32 %v787, %v959
  %v984 = vmul.f32 %v747, %v967
  %v985 = vmul.f32 %v787, %v968
  %v986 = vmul.f32 %v747, %v976
  %v987 = vmul.f32 %v787, %v977
  %v988 = vld [vmem:[%s7] sm:$0xff]
  %v989 = vld [vmem:[%s7 + $0x8] sm:$0xff]
  %v990 = vld [vmem:[%s7 + $0x10] sm:$0xff]
  %v991 = vld [vmem:[%s7 + $0x18] sm:$0xff]
  %v992 = vld [vmem:[%s7 + $0x20] sm:$0xff]
  %v993 = vld [vmem:[%s7 + $0x28] sm:$0xff]
  %v994 = vld [vmem:[%s7 + $0x30] sm:$0xff]
  %v995 = vld [vmem:[%s7 + $0x38] sm:$0xff]
  %v996 = vld [vmem:[%s7 + $0x40] sm:$0xff]
  %v997 = vld [vmem:[%s7 + $0x48] sm:$0xff]
  %v998 = vld [vmem:[%s7 + $0x50] sm:$0xff]
  %v999 = vld [vmem:[%s7 + $0x58] sm:$0xff]
  %v1000 = vld [vmem:[%s7 + $0x60] sm:$0xff]
  %v1001 = vld [vmem:[%s7 + $0x68] sm:$0xff]
  %v1002 = vld [vmem:[%s7 + $0x70] sm:$0xff]
  %v1003 = vld [vmem:[%s7 + $0x78] sm:$0xff]
  %v1004 = vld [vmem:[%s7 + $0x80] sm:$0xff]
  %v1005 = vld [vmem:[%s7 + $0x88] sm:$0xff]
  %v1006 = vld [vmem:[%s7 + $0x90] sm:$0xff]
  %v1007 = vld [vmem:[%s7 + $0x98] sm:$0xff]
  %v1008 = vld [vmem:[%s7 + $0xa0] sm:$0xff]
  %v1009 = vld [vmem:[%s7 + $0xa8] sm:$0xff]
  %v1010 = vld [vmem:[%s7 + $0xb0] sm:$0xff]
  %v1011 = vld [vmem:[%s7 + $0xb8] sm:$0xff]
  %v1012 = vld [vmem:[%s7 + $0xc0] sm:$0xff]
  %v1013 = vld [vmem:[%s7 + $0xc8] sm:$0xff]
  %v1014 = vld [vmem:[%s7 + $0xd0] sm:$0xff]
  %v1015 = vld [vmem:[%s7 + $0xd8] sm:$0xff]
  %v1016 = vld [vmem:[%s7 + $0xe0] sm:$0xff]
  %v1017 = vld [vmem:[%s7 + $0xe8] sm:$0xff]
  %v1018 = vld [vmem:[%s7 + $0xf0] sm:$0xff]
  %v1019 = vld [vmem:[%s7 + $0xf8] sm:$0xff]
  %1020 = vmatpush.msra.mxu0 %v1003
  %1021 = vmatpush.msra.mxu0 %v1002
  %1022 = vmatpush.msra.mxu0 %v1001
  %1023 = vmatpush.msra.mxu0 %v1000
  %1024 = vmatpush.msra.mxu0 %v999
  %1025 = vmatpush.msra.mxu0 %v998
  %1026 = vmatpush.msra.mxu0 %v997
  %1027 = vmatpush.msra.mxu0 %v996
  %1028 = vmatpush.msra.mxu0 %v995
  %1029 = vmatpush.msra.mxu0 %v994
  %1030 = vmatpush.msra.mxu0 %v993
  %1031 = vmatpush.msra.mxu0 %v992
  %1032 = vmatpush.msra.mxu0 %v991
  %1033 = vmatpush.msra.mxu0 %v990
  %1034 = vmatpush.msra.mxu0 %v989
  %1035 = vmatpush.msra.mxu0 %v988
  %1036 = vmatmul.f32.gmra.mxu0 %v949
  %v1037 = vpop.f32.mrf.mxu0
  %v1038 = vadd.f32 0.0, %v1037
  %1039 = vmatmul.f32.gmra.mxu0 %v960
  %v1040 = vpop.f32.mrf.mxu0
  %v1041 = vadd.f32 0.0, %v1040
  %1042 = vmatmul.f32.gmra.mxu0 %v969
  %v1043 = vpop.f32.mrf.mxu0
  %v1044 = vadd.f32 0.0, %v1043
  %1045 = vmatmul.f32.gmra.mxu0 %v978
  %v1046 = vpop.f32.mrf.mxu0
  %v1047 = vadd.f32 0.0, %v1046
  %1048 = vmatmul.f32.gmra.mxu0 %v980
  %v1049 = vpop.f32.mrf.mxu0
  %v1050 = vadd.f32 0.0, %v1049
  %1051 = vmatmul.f32.gmra.mxu0 %v982
  %v1052 = vpop.f32.mrf.mxu0
  %v1053 = vadd.f32 0.0, %v1052
  %1054 = vmatmul.f32.gmra.mxu0 %v984
  %v1055 = vpop.f32.mrf.mxu0
  %v1056 = vadd.f32 0.0, %v1055
  %1057 = vmatmul.f32.gmra.mxu0 %v986
  %v1058 = vpop.f32.mrf.mxu0
  %v1059 = vadd.f32 0.0, %v1058
  %1060 = vdwg.mxu0
  %1061 = vmatpush.msra.mxu0 %v1019
  %1062 = vmatpush.msra.mxu0 %v1018
  %1063 = vmatpush.msra.mxu0 %v1017
  %1064 = vmatpush.msra.mxu0 %v1016
  %1065 = vmatpush.msra.mxu0 %v1015
  %1066 = vmatpush.msra.mxu0 %v1014
  %1067 = vmatpush.msra.mxu0 %v1013
  %1068 = vmatpush.msra.mxu0 %v1012
  %1069 = vmatpush.msra.mxu0 %v1011
  %1070 = vmatpush.msra.mxu0 %v1010
  %1071 = vmatpush.msra.mxu0 %v1009
  %1072 = vmatpush.msra.mxu0 %v1008
  %1073 = vmatpush.msra.mxu0 %v1007
  %1074 = vmatpush.msra.mxu0 %v1006
  %1075 = vmatpush.msra.mxu0 %v1005
  %1076 = vmatpush.msra.mxu0 %v1004
  %1077 = vmatmul.f32.gmra.mxu0 %v950
  %v1078 = vpop.f32.mrf.mxu0
  %v1079 = vadd.f32 %v1038, %v1078
  %1080 = vmatmul.f32.gmra.mxu0 %v961
  %v1081 = vpop.f32.mrf.mxu0
  %v1082 = vadd.f32 %v1041, %v1081
  %1083 = vmatmul.f32.gmra.mxu0 %v970
  %v1084 = vpop.f32.mrf.mxu0
  %v1085 = vadd.f32 %v1044, %v1084
  %1086 = vmatmul.f32.gmra.mxu0 %v979
  %v1087 = vpop.f32.mrf.mxu0
  %v1088 = vadd.f32 %v1047, %v1087
  %1089 = vmatmul.f32.gmra.mxu0 %v981
  %v1090 = vpop.f32.mrf.mxu0
  %v1091 = vadd.f32 %v1050, %v1090
  %1092 = vmatmul.f32.gmra.mxu0 %v983
  %v1093 = vpop.f32.mrf.mxu0
  %v1094 = vadd.f32 %v1053, %v1093
  %1095 = vmatmul.f32.gmra.mxu0 %v985
  %v1096 = vpop.f32.mrf.mxu0
  %v1097 = vadd.f32 %v1056, %v1096
  %1098 = vmatmul.f32.gmra.mxu0 %v987
  %v1099 = vpop.f32.mrf.mxu0
  %v1100 = vadd.f32 %v1059, %v1099
  %1101 = vdwg.mxu0
  %v1102 = vmax.f32 %v1079, %v1082
  %v1103 = vmax.f32 %v1102, %v1085
  %v1104 = vmax.f32 %v1103, %v1088
  %v1105 = vmax.f32 %v1104, %v1091
  %v1106 = vmax.f32 %v1105, %v1094
  %v1107 = vmax.f32 %v1106, %v1097
  %v1108 = vmax.f32 %v1107, %v1100
  %v1109 = vsub.f32 %v1079, %v1108
  %v1110 = vmul.f32 %v1109, 1.442695
  %v1111 = vpow.pop %v1110
  %v1112 = vsub.f32 %v1082, %v1108
  %v1113 = vmul.f32 %v1112, 1.442695
  %v1114 = vpow.pop %v1113
  %v1115 = vsub.f32 %v1085, %v1108
  %v1116 = vmul.f32 %v1115, 1.442695
  %v1117 = vpow.pop %v1116
  %v1118 = vsub.f32 %v1088, %v1108
  %v1119 = vmul.f32 %v1118, 1.442695
  %v1120 = vpow.pop %v1119
  %v1121 = vsub.f32 %v1091, %v1108
  %v1122 = vmul.f32 %v1121, 1.442695
  %v1123 = vpow.pop %v1122
  %v1124 = vsub.f32 %v1094, %v1108
  %v1125 = vmul.f32 %v1124, 1.442695
  %v1126 = vpow.pop %v1125
  %v1127 = vsub.f32 %v1097, %v1108
  %v1128 = vmul.f32 %v1127, 1.442695
  %v1129 = vpow.pop %v1128
  %v1130 = vsub.f32 %v1100, %v1108
  %v1131 = vmul.f32 %v1130, 1.442695
  %v1132 = vpow.pop %v1131
  %v1133 = vadd.f32 %v1111, %v1114
  %v1134 = vadd.f32 %v1133, %v1117
  %v1135 = vadd.f32 %v1134, %v1120
  %v1136 = vadd.f32 %v1135, %v1123
  %v1137 = vadd.f32 %v1136, %v1126
  %v1138 = vadd.f32 %v1137, %v1129
  %v1139 = vadd.f32 %v1138, %v1132
  %v1140 = vrcp.pop %v1139
  %v1141 = vmul.f32 %v1111, %v1140
  %v1142 = vmul.f32 %v1114, %v1140
  %v1143 = vmul.f32 %v1117, %v1140
  %v1144 = vmul.f32 %v1120, %v1140
  %v1145 = vmul.f32 %v1123, %v1140
  %v1146 = vmul.f32 %v1126, %v1140
  %v1147 = vmul.f32 %v1129, %v1140
  %v1148 = vmul.f32 %v1132, %v1140
  %v1149 = vld [vmem:[%s8] sm:$0xff]
  %v1150 = vld [vmem:[%s8 + $0x8] sm:$0xff]
  %vm1151 = vcmask 64512
  %v1153 = vsel %vm1151, %v1141, 0
  %v1156 = vsel %vm1151, %v1142, 0
  %v1159 = vsel %vm1151, %v1143, 0
  %v1162 = vsel %vm1151, %v1144, 0
  %v1165 = vsel %vm1151, %v1145, 0
  %v1168 = vsel %vm1151, %v1146, 0
  %v1171 = vsel %vm1151, %v1147, 0
  %v1174 = vsel %vm1151, %v1148, 0
  %1176 = vmatpush.msra.mxu0 0.0
  %1177 = vmatpush.msra.mxu0 0.0
  %1178 = vmatpush.msra.mxu0 0.0
  %1179 = vmatpush.msra.mxu0 0.0
  %1180 = vmatpush.msra.mxu0 0.0
  %1181 = vmatpush.msra.mxu0 0.0
  %1182 = vmatpush.msra.mxu0 0.0
  %1183 = vmatpush.msra.mxu0 0.0
  %1184 = vmatpush.msra.mxu0 0.0
  %1185 = vmatpush.msra.mxu0 0.0
  %1186 = vmatpush.msra.mxu0 0.0
  %1187 = vmatpush.msra.mxu0 0.0
  %1188 = vmatpush.msra.mxu0 0.0
  %1189 = vmatpush.msra.mxu0 0.0
  %1190 = vmatpush.msra.mxu0 0.0
  %1191 = vmatpush.msra.mxu0 %v1149
  %1192 = vmatmul.f32.gmra.mxu0 %v1153
  %v1193 = vpop.f32.mrf.mxu0
  %v1194 = vadd.f32 0.0, %v1193
  %1195 = vmatmul.f32.gmra.mxu0 %v1156
  %v1196 = vpop.f32.mrf.mxu0
  %v1197 = vadd.f32 0.0, %v1196
  %1198 = vmatmul.f32.gmra.mxu0 %v1159
  %v1199 = vpop.f32.mrf.mxu0
  %v1200 = vadd.f32 0.0, %v1199
  %1201 = vmatmul.f32.gmra.mxu0 %v1162
  %v1202 = vpop.f32.mrf.mxu0
  %v1203 = vadd.f32 0.0, %v1202
  %1204 = vmatmul.f32.gmra.mxu0 %v1165
  %v1205 = vpop.f32.mrf.mxu0
  %v1206 = vadd.f32 0.0, %v1205
  %1207 = vmatmul.f32.gmra.mxu0 %v1168
  %v1208 = vpop.f32.mrf.mxu0
  %v1209 = vadd.f32 0.0, %v1208
  %1210 = vmatmul.f32.gmra.mxu0 %v1171
  %v1211 = vpop.f32.mrf.mxu0
  %v1212 = vadd.f32 0.0, %v1211
  %1213 = vmatmul.f32.gmra.mxu0 %v1174
  %v1214 = vpop.f32.mrf.mxu0
  %v1215 = vadd.f32 0.0, %v1214
  %1216 = vdwg.mxu0
  %1217 = vmatpush.msra.mxu0 0.0
  %1218 = vmatpush.msra.mxu0 0.0
  %1219 = vmatpush.msra.mxu0 0.0
  %1220 = vmatpush.msra.mxu0 0.0
  %1221 = vmatpush.msra.mxu0 0.0
  %1222 = vmatpush.msra.mxu0 0.0
  %1223 = vmatpush.msra.mxu0 0.0
  %1224 = vmatpush.msra.mxu0 0.0
  %1225 = vmatpush.msra.mxu0 0.0
  %1226 = vmatpush.msra.mxu0 0.0
  %1227 = vmatpush.msra.mxu0 0.0
  %1228 = vmatpush.msra.mxu0 0.0
  %1229 = vmatpush.msra.mxu0 0.0
  %1230 = vmatpush.msra.mxu0 0.0
  %1231 = vmatpush.msra.mxu0 0.0
  %1232 = vmatpush.msra.mxu0 %v1150
  %1233 = vmatmul.f32.gmra.mxu0 %v1153
  %v1234 = vpop.f32.mrf.mxu0
  %v1235 = vadd.f32 0.0, %v1234
  %1236 = vmatmul.f32.gmra.mxu0 %v1156
  %v1237 = vpop.f32.mrf.mxu0
  %v1238 = vadd.f32 0.0, %v1237
  %1239 = vmatmul.f32.gmra.mxu0 %v1159
  %v1240 = vpop.f32.mrf.mxu0
  %v1241 = vadd.f32 0.0, %v1240
  %1242 = vmatmul.f32.gmra.mxu0 %v1162
  %v1243 = vpop.f32.mrf.mxu0
  %v1244 = vadd.f32 0.0, %v1243
  %1245 = vmatmul.f32.gmra.mxu0 %v1165
  %v1246 = vpop.f32.mrf.mxu0
  %v1247 = vadd.f32 0.0, %v1246
  %1248 = vmatmul.f32.gmra.mxu0 %v1168
  %v1249 = vpop.f32.mrf.mxu0
  %v1250 = vadd.f32 0.0, %v1249
  %1251 = vmatmul.f32.gmra.mxu0 %v1171
  %v1252 = vpop.f32.mrf.mxu0
  %v1253 = vadd.f32 0.0, %v1252
  %1254 = vmatmul.f32.gmra.mxu0 %v1174
  %v1255 = vpop.f32.mrf.mxu0
  %v1256 = vadd.f32 0.0, %v1255
  %1257 = vdwg.mxu0
  %v1258 = vmul.f32 %v1194, %v907
  %v1259 = vmul.f32 %v1235, %v947
  %1260 = vrot.lane.b32.xlu0 %v907, 32
  %v1261 = vpop.permute.xlu0 %1260
  %1262 = vrot.lane.b32.xlu0 %v947, 32
  %v1263 = vpop.permute.xlu0 %1262
  %v1264 = vsel %vm957, %v1261, %v1263
  %v1265 = vsel %vm957, %v1263, %v1261
  %v1266 = vmul.f32 %v1197, %v1265
  %v1267 = vmul.f32 %v1238, %v1264
  %v1268 = vadd.f32 %v1258, %v1266
  %v1269 = vadd.f32 %v1259, %v1267
  %1270 = vrot.lane.b32.xlu0 %v907, 64
  %v1271 = vpop.permute.xlu0 %1270
  %1272 = vrot.lane.b32.xlu0 %v947, 64
  %v1273 = vpop.permute.xlu0 %1272
  %v1274 = vsel %vm966, %v1271, %v1273
  %v1275 = vsel %vm966, %v1273, %v1271
  %v1276 = vmul.f32 %v1200, %v1275
  %v1277 = vmul.f32 %v1241, %v1274
  %v1278 = vadd.f32 %v1268, %v1276
  %v1279 = vadd.f32 %v1269, %v1277
  %1280 = vrot.lane.b32.xlu0 %v907, 96
  %v1281 = vpop.permute.xlu0 %1280
  %1282 = vrot.lane.b32.xlu0 %v947, 96
  %v1283 = vpop.permute.xlu0 %1282
  %v1284 = vsel %vm975, %v1281, %v1283
  %v1285 = vsel %vm975, %v1283, %v1281
  %v1286 = vmul.f32 %v1203, %v1285
  %v1287 = vmul.f32 %v1244, %v1284
  %v1288 = vadd.f32 %v1278, %v1286
  %v1289 = vadd.f32 %v1279, %v1287
  %v1290 = vmul.f32 %v1206, %v947
  %v1291 = vmul.f32 %v1247, %v907
  %v1292 = vadd.f32 %v1288, %v1290
  %v1293 = vadd.f32 %v1289, %v1291
  %v1294 = vmul.f32 %v1209, %v1264
  %v1295 = vmul.f32 %v1250, %v1265
  %v1296 = vadd.f32 %v1292, %v1294
  %v1297 = vadd.f32 %v1293, %v1295
  %v1298 = vmul.f32 %v1212, %v1274
  %v1299 = vmul.f32 %v1253, %v1275
  %v1300 = vadd.f32 %v1296, %v1298
  %v1301 = vadd.f32 %v1297, %v1299
  %v1302 = vmul.f32 %v1215, %v1284
  %v1303 = vmul.f32 %v1256, %v1285
  %v1304 = vadd.f32 %v1300, %v1302
  %v1305 = vadd.f32 %v1301, %v1303
  %v1306 = vld [vmem:[%s6] sm:$0xff]
  %v1307 = vld [vmem:[%s6 + $0x8] sm:$0xff]
  %v1308 = vld [vmem:[%s6 + $0x10] sm:$0xff]
  %v1309 = vld [vmem:[%s6 + $0x18] sm:$0xff]
  %v1310 = vld [vmem:[%s6 + $0x20] sm:$0xff]
  %v1311 = vld [vmem:[%s6 + $0x28] sm:$0xff]
  %v1312 = vld [vmem:[%s6 + $0x30] sm:$0xff]
  %v1313 = vld [vmem:[%s6 + $0x38] sm:$0xff]
  %v1314 = vld [vmem:[%s6 + $0x40] sm:$0xff]
  %v1315 = vld [vmem:[%s6 + $0x48] sm:$0xff]
  %v1316 = vld [vmem:[%s6 + $0x50] sm:$0xff]
  %v1317 = vld [vmem:[%s6 + $0x58] sm:$0xff]
  %v1318 = vld [vmem:[%s6 + $0x60] sm:$0xff]
  %v1319 = vld [vmem:[%s6 + $0x68] sm:$0xff]
  %v1320 = vld [vmem:[%s6 + $0x70] sm:$0xff]
  %v1321 = vld [vmem:[%s6 + $0x78] sm:$0xff]
  %v1322 = vld [vmem:[%s6 + $0x80] sm:$0xff]
  %v1323 = vld [vmem:[%s6 + $0x88] sm:$0xff]
  %v1324 = vld [vmem:[%s6 + $0x90] sm:$0xff]
  %v1325 = vld [vmem:[%s6 + $0x98] sm:$0xff]
  %v1326 = vld [vmem:[%s6 + $0xa0] sm:$0xff]
  %v1327 = vld [vmem:[%s6 + $0xa8] sm:$0xff]
  %v1328 = vld [vmem:[%s6 + $0xb0] sm:$0xff]
  %v1329 = vld [vmem:[%s6 + $0xb8] sm:$0xff]
  %v1330 = vld [vmem:[%s6 + $0xc0] sm:$0xff]
  %v1331 = vld [vmem:[%s6 + $0xc8] sm:$0xff]
  %v1332 = vld [vmem:[%s6 + $0xd0] sm:$0xff]
  %v1333 = vld [vmem:[%s6 + $0xd8] sm:$0xff]
  %v1334 = vld [vmem:[%s6 + $0xe0] sm:$0xff]
  %v1335 = vld [vmem:[%s6 + $0xe8] sm:$0xff]
  %v1336 = vld [vmem:[%s6 + $0xf0] sm:$0xff]
  %v1337 = vld [vmem:[%s6 + $0xf8] sm:$0xff]
  %v1338 = vld [vmem:[%s6 + $0x100] sm:$0xff]
  %v1339 = vld [vmem:[%s6 + $0x108] sm:$0xff]
  %v1340 = vld [vmem:[%s6 + $0x110] sm:$0xff]
  %v1341 = vld [vmem:[%s6 + $0x118] sm:$0xff]
  %v1342 = vld [vmem:[%s6 + $0x120] sm:$0xff]
  %v1343 = vld [vmem:[%s6 + $0x128] sm:$0xff]
  %v1344 = vld [vmem:[%s6 + $0x130] sm:$0xff]
  %v1345 = vld [vmem:[%s6 + $0x138] sm:$0xff]
  %v1346 = vld [vmem:[%s6 + $0x140] sm:$0xff]
  %v1347 = vld [vmem:[%s6 + $0x148] sm:$0xff]
  %v1348 = vld [vmem:[%s6 + $0x150] sm:$0xff]
  %v1349 = vld [vmem:[%s6 + $0x158] sm:$0xff]
  %v1350 = vld [vmem:[%s6 + $0x160] sm:$0xff]
  %v1351 = vld [vmem:[%s6 + $0x168] sm:$0xff]
  %v1352 = vld [vmem:[%s6 + $0x170] sm:$0xff]
  %v1353 = vld [vmem:[%s6 + $0x178] sm:$0xff]
  %v1354 = vld [vmem:[%s6 + $0x180] sm:$0xff]
  %v1355 = vld [vmem:[%s6 + $0x188] sm:$0xff]
  %v1356 = vld [vmem:[%s6 + $0x190] sm:$0xff]
  %v1357 = vld [vmem:[%s6 + $0x198] sm:$0xff]
  %v1358 = vld [vmem:[%s6 + $0x1a0] sm:$0xff]
  %v1359 = vld [vmem:[%s6 + $0x1a8] sm:$0xff]
  %v1360 = vld [vmem:[%s6 + $0x1b0] sm:$0xff]
  %v1361 = vld [vmem:[%s6 + $0x1b8] sm:$0xff]
  %v1362 = vld [vmem:[%s6 + $0x1c0] sm:$0xff]
  %v1363 = vld [vmem:[%s6 + $0x1c8] sm:$0xff]
  %v1364 = vld [vmem:[%s6 + $0x1d0] sm:$0xff]
  %v1365 = vld [vmem:[%s6 + $0x1d8] sm:$0xff]
  %v1366 = vld [vmem:[%s6 + $0x1e0] sm:$0xff]
  %v1367 = vld [vmem:[%s6 + $0x1e8] sm:$0xff]
  %v1368 = vld [vmem:[%s6 + $0x1f0] sm:$0xff]
  %v1369 = vld [vmem:[%s6 + $0x1f8] sm:$0xff]
  %1370 = vmatpush.msra.mxu0 %v1336
  %1371 = vmatpush.msra.mxu0 %v1334
  %1372 = vmatpush.msra.mxu0 %v1332
  %1373 = vmatpush.msra.mxu0 %v1330
  %1374 = vmatpush.msra.mxu0 %v1328
  %1375 = vmatpush.msra.mxu0 %v1326
  %1376 = vmatpush.msra.mxu0 %v1324
  %1377 = vmatpush.msra.mxu0 %v1322
  %1378 = vmatpush.msra.mxu0 %v1320
  %1379 = vmatpush.msra.mxu0 %v1318
  %1380 = vmatpush.msra.mxu0 %v1316
  %1381 = vmatpush.msra.mxu0 %v1314
  %1382 = vmatpush.msra.mxu0 %v1312
  %1383 = vmatpush.msra.mxu0 %v1310
  %1384 = vmatpush.msra.mxu0 %v1308
  %1385 = vmatpush.msra.mxu0 %v1306
  %1386 = vmatmul.f32.gmra.mxu0 %v1304
  %v1387 = vpop.f32.mrf.mxu0
  %v1388 = vadd.f32 %v515, %v1387
  %1389 = vdwg.mxu0
  %1390 = vmatpush.msra.mxu0 %v1368
  %1391 = vmatpush.msra.mxu0 %v1366
  %1392 = vmatpush.msra.mxu0 %v1364
  %1393 = vmatpush.msra.mxu0 %v1362
  %1394 = vmatpush.msra.mxu0 %v1360
  %1395 = vmatpush.msra.mxu0 %v1358
  %1396 = vmatpush.msra.mxu0 %v1356
  %1397 = vmatpush.msra.mxu0 %v1354
  %1398 = vmatpush.msra.mxu0 %v1352
  %1399 = vmatpush.msra.mxu0 %v1350
  %1400 = vmatpush.msra.mxu0 %v1348
  %1401 = vmatpush.msra.mxu0 %v1346
  %1402 = vmatpush.msra.mxu0 %v1344
  %1403 = vmatpush.msra.mxu0 %v1342
  %1404 = vmatpush.msra.mxu0 %v1340
  %1405 = vmatpush.msra.mxu0 %v1338
  %1406 = vmatmul.f32.gmra.mxu0 %v1305
  %v1407 = vpop.f32.mrf.mxu0
  %v1408 = vadd.f32 %v1388, %v1407
  %1409 = vdwg.mxu0
  %1410 = vmatpush.msra.mxu0 %v1337
  %1411 = vmatpush.msra.mxu0 %v1335
  %1412 = vmatpush.msra.mxu0 %v1333
  %1413 = vmatpush.msra.mxu0 %v1331
  %1414 = vmatpush.msra.mxu0 %v1329
  %1415 = vmatpush.msra.mxu0 %v1327
  %1416 = vmatpush.msra.mxu0 %v1325
  %1417 = vmatpush.msra.mxu0 %v1323
  %1418 = vmatpush.msra.mxu0 %v1321
  %1419 = vmatpush.msra.mxu0 %v1319
  %1420 = vmatpush.msra.mxu0 %v1317
  %1421 = vmatpush.msra.mxu0 %v1315
  %1422 = vmatpush.msra.mxu0 %v1313
  %1423 = vmatpush.msra.mxu0 %v1311
  %1424 = vmatpush.msra.mxu0 %v1309
  %1425 = vmatpush.msra.mxu0 %v1307
  %1426 = vmatmul.f32.gmra.mxu0 %v1304
  %v1427 = vpop.f32.mrf.mxu0
  %v1428 = vadd.f32 %v516, %v1427
  %1429 = vdwg.mxu0
  %1430 = vmatpush.msra.mxu0 %v1369
  %1431 = vmatpush.msra.mxu0 %v1367
  %1432 = vmatpush.msra.mxu0 %v1365
  %1433 = vmatpush.msra.mxu0 %v1363
  %1434 = vmatpush.msra.mxu0 %v1361
  %1435 = vmatpush.msra.mxu0 %v1359
  %1436 = vmatpush.msra.mxu0 %v1357
  %1437 = vmatpush.msra.mxu0 %v1355
  %1438 = vmatpush.msra.mxu0 %v1353
  %1439 = vmatpush.msra.mxu0 %v1351
  %1440 = vmatpush.msra.mxu0 %v1349
  %1441 = vmatpush.msra.mxu0 %v1347
  %1442 = vmatpush.msra.mxu0 %v1345
  %1443 = vmatpush.msra.mxu0 %v1343
  %1444 = vmatpush.msra.mxu0 %v1341
  %1445 = vmatpush.msra.mxu0 %v1339
  %1446 = vmatmul.f32.gmra.mxu0 %v1305
  %v1447 = vpop.f32.mrf.mxu0
  %v1448 = vadd.f32 %v1428, %v1447
  %1449 = vdwg.mxu0
  %v1450 = vld [vmem:[%s9] sm:$0xff]
  %v1451 = vld [vmem:[%s9 + $0x8] sm:$0xff]
  %v1452 = vld [vmem:[%s9 + $0x10] sm:$0xff]
  %v1453 = vld [vmem:[%s9 + $0x18] sm:$0xff]
  %v1454 = vld [vmem:[%s9 + $0x20] sm:$0xff]
  %v1455 = vld [vmem:[%s9 + $0x28] sm:$0xff]
  %v1456 = vld [vmem:[%s9 + $0x30] sm:$0xff]
  %v1457 = vld [vmem:[%s9 + $0x38] sm:$0xff]
  %v1458 = vld [vmem:[%s9 + $0x40] sm:$0xff]
  %v1459 = vld [vmem:[%s9 + $0x48] sm:$0xff]
  %v1460 = vld [vmem:[%s9 + $0x50] sm:$0xff]
  %v1461 = vld [vmem:[%s9 + $0x58] sm:$0xff]
  %v1462 = vld [vmem:[%s9 + $0x60] sm:$0xff]
  %v1463 = vld [vmem:[%s9 + $0x68] sm:$0xff]
  %v1464 = vld [vmem:[%s9 + $0x70] sm:$0xff]
  %v1465 = vld [vmem:[%s9 + $0x78] sm:$0xff]
  %v1466 = vld [vmem:[%s9 + $0x80] sm:$0xff]
  %v1467 = vld [vmem:[%s9 + $0x88] sm:$0xff]
  %v1468 = vld [vmem:[%s9 + $0x90] sm:$0xff]
  %v1469 = vld [vmem:[%s9 + $0x98] sm:$0xff]
  %v1470 = vld [vmem:[%s9 + $0xa0] sm:$0xff]
  %v1471 = vld [vmem:[%s9 + $0xa8] sm:$0xff]
  %v1472 = vld [vmem:[%s9 + $0xb0] sm:$0xff]
  %v1473 = vld [vmem:[%s9 + $0xb8] sm:$0xff]
  %v1474 = vld [vmem:[%s9 + $0xc0] sm:$0xff]
  %v1475 = vld [vmem:[%s9 + $0xc8] sm:$0xff]
  %v1476 = vld [vmem:[%s9 + $0xd0] sm:$0xff]
  %v1477 = vld [vmem:[%s9 + $0xd8] sm:$0xff]
  %v1478 = vld [vmem:[%s9 + $0xe0] sm:$0xff]
  %v1479 = vld [vmem:[%s9 + $0xe8] sm:$0xff]
  %v1480 = vld [vmem:[%s9 + $0xf0] sm:$0xff]
  %v1481 = vld [vmem:[%s9 + $0xf8] sm:$0xff]
  %v1482 = vld [vmem:[%s9 + $0x100] sm:$0xff]
  %v1483 = vld [vmem:[%s9 + $0x108] sm:$0xff]
  %v1484 = vld [vmem:[%s9 + $0x110] sm:$0xff]
  %v1485 = vld [vmem:[%s9 + $0x118] sm:$0xff]
  %v1486 = vld [vmem:[%s9 + $0x120] sm:$0xff]
  %v1487 = vld [vmem:[%s9 + $0x128] sm:$0xff]
  %v1488 = vld [vmem:[%s9 + $0x130] sm:$0xff]
  %v1489 = vld [vmem:[%s9 + $0x138] sm:$0xff]
  %v1490 = vld [vmem:[%s9 + $0x140] sm:$0xff]
  %v1491 = vld [vmem:[%s9 + $0x148] sm:$0xff]
  %v1492 = vld [vmem:[%s9 + $0x150] sm:$0xff]
  %v1493 = vld [vmem:[%s9 + $0x158] sm:$0xff]
  %v1494 = vld [vmem:[%s9 + $0x160] sm:$0xff]
  %v1495 = vld [vmem:[%s9 + $0x168] sm:$0xff]
  %v1496 = vld [vmem:[%s9 + $0x170] sm:$0xff]
  %v1497 = vld [vmem:[%s9 + $0x178] sm:$0xff]
  %v1498 = vld [vmem:[%s9 + $0x180] sm:$0xff]
  %v1499 = vld [vmem:[%s9 + $0x188] sm:$0xff]
  %v1500 = vld [vmem:[%s9 + $0x190] sm:$0xff]
  %v1501 = vld [vmem:[%s9 + $0x198] sm:$0xff]
  %v1502 = vld [vmem:[%s9 + $0x1a0] sm:$0xff]
  %v1503 = vld [vmem:[%s9 + $0x1a8] sm:$0xff]
  %v1504 = vld [vmem:[%s9 + $0x1b0] sm:$0xff]
  %v1505 = vld [vmem:[%s9 + $0x1b8] sm:$0xff]
  %v1506 = vld [vmem:[%s9 + $0x1c0] sm:$0xff]
  %v1507 = vld [vmem:[%s9 + $0x1c8] sm:$0xff]
  %v1508 = vld [vmem:[%s9 + $0x1d0] sm:$0xff]
  %v1509 = vld [vmem:[%s9 + $0x1d8] sm:$0xff]
  %v1510 = vld [vmem:[%s9 + $0x1e0] sm:$0xff]
  %v1511 = vld [vmem:[%s9 + $0x1e8] sm:$0xff]
  %v1512 = vld [vmem:[%s9 + $0x1f0] sm:$0xff]
  %v1513 = vld [vmem:[%s9 + $0x1f8] sm:$0xff]
  %v1514 = vld [vmem:[%s9 + $0x200] sm:$0xff]
  %v1515 = vld [vmem:[%s9 + $0x208] sm:$0xff]
  %v1516 = vld [vmem:[%s9 + $0x210] sm:$0xff]
  %v1517 = vld [vmem:[%s9 + $0x218] sm:$0xff]
  %v1518 = vld [vmem:[%s9 + $0x220] sm:$0xff]
  %v1519 = vld [vmem:[%s9 + $0x228] sm:$0xff]
  %v1520 = vld [vmem:[%s9 + $0x230] sm:$0xff]
  %v1521 = vld [vmem:[%s9 + $0x238] sm:$0xff]
  %v1522 = vld [vmem:[%s9 + $0x240] sm:$0xff]
  %v1523 = vld [vmem:[%s9 + $0x248] sm:$0xff]
  %v1524 = vld [vmem:[%s9 + $0x250] sm:$0xff]
  %v1525 = vld [vmem:[%s9 + $0x258] sm:$0xff]
  %v1526 = vld [vmem:[%s9 + $0x260] sm:$0xff]
  %v1527 = vld [vmem:[%s9 + $0x268] sm:$0xff]
  %v1528 = vld [vmem:[%s9 + $0x270] sm:$0xff]
  %v1529 = vld [vmem:[%s9 + $0x278] sm:$0xff]
  %v1530 = vld [vmem:[%s9 + $0x280] sm:$0xff]
  %v1531 = vld [vmem:[%s9 + $0x288] sm:$0xff]
  %v1532 = vld [vmem:[%s9 + $0x290] sm:$0xff]
  %v1533 = vld [vmem:[%s9 + $0x298] sm:$0xff]
  %v1534 = vld [vmem:[%s9 + $0x2a0] sm:$0xff]
  %v1535 = vld [vmem:[%s9 + $0x2a8] sm:$0xff]
  %v1536 = vld [vmem:[%s9 + $0x2b0] sm:$0xff]
  %v1537 = vld [vmem:[%s9 + $0x2b8] sm:$0xff]
  %v1538 = vld [vmem:[%s9 + $0x2c0] sm:$0xff]
  %v1539 = vld [vmem:[%s9 + $0x2c8] sm:$0xff]
  %v1540 = vld [vmem:[%s9 + $0x2d0] sm:$0xff]
  %v1541 = vld [vmem:[%s9 + $0x2d8] sm:$0xff]
  %v1542 = vld [vmem:[%s9 + $0x2e0] sm:$0xff]
  %v1543 = vld [vmem:[%s9 + $0x2e8] sm:$0xff]
  %v1544 = vld [vmem:[%s9 + $0x2f0] sm:$0xff]
  %v1545 = vld [vmem:[%s9 + $0x2f8] sm:$0xff]
  %v1546 = vld [vmem:[%s9 + $0x300] sm:$0xff]
  %v1547 = vld [vmem:[%s9 + $0x308] sm:$0xff]
  %v1548 = vld [vmem:[%s9 + $0x310] sm:$0xff]
  %v1549 = vld [vmem:[%s9 + $0x318] sm:$0xff]
  %v1550 = vld [vmem:[%s9 + $0x320] sm:$0xff]
  %v1551 = vld [vmem:[%s9 + $0x328] sm:$0xff]
  %v1552 = vld [vmem:[%s9 + $0x330] sm:$0xff]
  %v1553 = vld [vmem:[%s9 + $0x338] sm:$0xff]
  %v1554 = vld [vmem:[%s9 + $0x340] sm:$0xff]
  %v1555 = vld [vmem:[%s9 + $0x348] sm:$0xff]
  %v1556 = vld [vmem:[%s9 + $0x350] sm:$0xff]
  %v1557 = vld [vmem:[%s9 + $0x358] sm:$0xff]
  %v1558 = vld [vmem:[%s9 + $0x360] sm:$0xff]
  %v1559 = vld [vmem:[%s9 + $0x368] sm:$0xff]
  %v1560 = vld [vmem:[%s9 + $0x370] sm:$0xff]
  %v1561 = vld [vmem:[%s9 + $0x378] sm:$0xff]
  %v1562 = vld [vmem:[%s9 + $0x380] sm:$0xff]
  %v1563 = vld [vmem:[%s9 + $0x388] sm:$0xff]
  %v1564 = vld [vmem:[%s9 + $0x390] sm:$0xff]
  %v1565 = vld [vmem:[%s9 + $0x398] sm:$0xff]
  %v1566 = vld [vmem:[%s9 + $0x3a0] sm:$0xff]
  %v1567 = vld [vmem:[%s9 + $0x3a8] sm:$0xff]
  %v1568 = vld [vmem:[%s9 + $0x3b0] sm:$0xff]
  %v1569 = vld [vmem:[%s9 + $0x3b8] sm:$0xff]
  %v1570 = vld [vmem:[%s9 + $0x3c0] sm:$0xff]
  %v1571 = vld [vmem:[%s9 + $0x3c8] sm:$0xff]
  %v1572 = vld [vmem:[%s9 + $0x3d0] sm:$0xff]
  %v1573 = vld [vmem:[%s9 + $0x3d8] sm:$0xff]
  %v1574 = vld [vmem:[%s9 + $0x3e0] sm:$0xff]
  %v1575 = vld [vmem:[%s9 + $0x3e8] sm:$0xff]
  %v1576 = vld [vmem:[%s9 + $0x3f0] sm:$0xff]
  %v1577 = vld [vmem:[%s9 + $0x3f8] sm:$0xff]
  %v1578 = vld [vmem:[%s10] sm:$0xf]
  %v1580 = vperm.slane %v1578, 0
  %v1581 = vperm.slane %v1578, 1
  %v1582 = vperm.slane %v1578, 2
  %v1583 = vperm.slane %v1578, 3
  %1588 = vmatpush.msra.mxu0 %v1510
  %1589 = vmatpush.msra.mxu0 %v1506
  %1590 = vmatpush.msra.mxu0 %v1502
  %1591 = vmatpush.msra.mxu0 %v1498
  %1592 = vmatpush.msra.mxu0 %v1494
  %1593 = vmatpush.msra.mxu0 %v1490
  %1594 = vmatpush.msra.mxu0 %v1486
  %1595 = vmatpush.msra.mxu0 %v1482
  %1596 = vmatpush.msra.mxu0 %v1478
  %1597 = vmatpush.msra.mxu0 %v1474
  %1598 = vmatpush.msra.mxu0 %v1470
  %1599 = vmatpush.msra.mxu0 %v1466
  %1600 = vmatpush.msra.mxu0 %v1462
  %1601 = vmatpush.msra.mxu0 %v1458
  %1602 = vmatpush.msra.mxu0 %v1454
  %1603 = vmatpush.msra.mxu0 %v1450
  %1604 = vmatmul.f32.gmra.mxu0 %v1408
  %v1605 = vpop.f32.mrf.mxu0
  %v1606 = vadd.f32 %v1580, %v1605
  %1607 = vdwg.mxu0
  %1608 = vmatpush.msra.mxu0 %v1574
  %1609 = vmatpush.msra.mxu0 %v1570
  %1610 = vmatpush.msra.mxu0 %v1566
  %1611 = vmatpush.msra.mxu0 %v1562
  %1612 = vmatpush.msra.mxu0 %v1558
  %1613 = vmatpush.msra.mxu0 %v1554
  %1614 = vmatpush.msra.mxu0 %v1550
  %1615 = vmatpush.msra.mxu0 %v1546
  %1616 = vmatpush.msra.mxu0 %v1542
  %1617 = vmatpush.msra.mxu0 %v1538
  %1618 = vmatpush.msra.mxu0 %v1534
  %1619 = vmatpush.msra.mxu0 %v1530
  %1620 = vmatpush.msra.mxu0 %v1526
  %1621 = vmatpush.msra.mxu0 %v1522
  %1622 = vmatpush.msra.mxu0 %v1518
  %1623 = vmatpush.msra.mxu0 %v1514
  %1624 = vmatmul.f32.gmra.mxu0 %v1448
  %v1625 = vpop.f32.mrf.mxu0
  %v1626 = vadd.f32 %v1606, %v1625
  %1627 = vdwg.mxu0
  %1628 = vmatpush.msra.mxu0 %v1511
  %1629 = vmatpush.msra.mxu0 %v1507
  %1630 = vmatpush.msra.mxu0 %v1503
  %1631 = vmatpush.msra.mxu0 %v1499
  %1632 = vmatpush.msra.mxu0 %v1495
  %1633 = vmatpush.msra.mxu0 %v1491
  %1634 = vmatpush.msra.mxu0 %v1487
  %1635 = vmatpush.msra.mxu0 %v1483
  %1636 = vmatpush.msra.mxu0 %v1479
  %1637 = vmatpush.msra.mxu0 %v1475
  %1638 = vmatpush.msra.mxu0 %v1471
  %1639 = vmatpush.msra.mxu0 %v1467
  %1640 = vmatpush.msra.mxu0 %v1463
  %1641 = vmatpush.msra.mxu0 %v1459
  %1642 = vmatpush.msra.mxu0 %v1455
  %1643 = vmatpush.msra.mxu0 %v1451
  %1644 = vmatmul.f32.gmra.mxu0 %v1408
  %v1645 = vpop.f32.mrf.mxu0
  %v1646 = vadd.f32 %v1581, %v1645
  %1647 = vdwg.mxu0
  %1648 = vmatpush.msra.mxu0 %v1575
  %1649 = vmatpush.msra.mxu0 %v1571
  %1650 = vmatpush.msra.mxu0 %v1567
  %1651 = vmatpush.msra.mxu0 %v1563
  %1652 = vmatpush.msra.mxu0 %v1559
  %1653 = vmatpush.msra.mxu0 %v1555
  %1654 = vmatpush.msra.mxu0 %v1551
  %1655 = vmatpush.msra.mxu0 %v1547
  %1656 = vmatpush.msra.mxu0 %v1543
  %1657 = vmatpush.msra.mxu0 %v1539
  %1658 = vmatpush.msra.mxu0 %v1535
  %1659 = vmatpush.msra.mxu0 %v1531
  %1660 = vmatpush.msra.mxu0 %v1527
  %1661 = vmatpush.msra.mxu0 %v1523
  %1662 = vmatpush.msra.mxu0 %v1519
  %1663 = vmatpush.msra.mxu0 %v1515
  %1664 = vmatmul.f32.gmra.mxu0 %v1448
  %v1665 = vpop.f32.mrf.mxu0
  %v1666 = vadd.f32 %v1646, %v1665
  %1667 = vdwg.mxu0
  %1668 = vmatpush.msra.mxu0 %v1512
  %1669 = vmatpush.msra.mxu0 %v1508
  %1670 = vmatpush.msra.mxu0 %v1504
  %1671 = vmatpush.msra.mxu0 %v1500
  %1672 = vmatpush.msra.mxu0 %v1496
  %1673 = vmatpush.msra.mxu0 %v1492
  %1674 = vmatpush.msra.mxu0 %v1488
  %1675 = vmatpush.msra.mxu0 %v1484
  %1676 = vmatpush.msra.mxu0 %v1480
  %1677 = vmatpush.msra.mxu0 %v1476
  %1678 = vmatpush.msra.mxu0 %v1472
  %1679 = vmatpush.msra.mxu0 %v1468
  %1680 = vmatpush.msra.mxu0 %v1464
  %1681 = vmatpush.msra.mxu0 %v1460
  %1682 = vmatpush.msra.mxu0 %v1456
  %1683 = vmatpush.msra.mxu0 %v1452
  %1684 = vmatmul.f32.gmra.mxu0 %v1408
  %v1685 = vpop.f32.mrf.mxu0
  %v1686 = vadd.f32 %v1582, %v1685
  %1687 = vdwg.mxu0
  %1688 = vmatpush.msra.mxu0 %v1576
  %1689 = vmatpush.msra.mxu0 %v1572
  %1690 = vmatpush.msra.mxu0 %v1568
  %1691 = vmatpush.msra.mxu0 %v1564
  %1692 = vmatpush.msra.mxu0 %v1560
  %1693 = vmatpush.msra.mxu0 %v1556
  %1694 = vmatpush.msra.mxu0 %v1552
  %1695 = vmatpush.msra.mxu0 %v1548
  %1696 = vmatpush.msra.mxu0 %v1544
  %1697 = vmatpush.msra.mxu0 %v1540
  %1698 = vmatpush.msra.mxu0 %v1536
  %1699 = vmatpush.msra.mxu0 %v1532
  %1700 = vmatpush.msra.mxu0 %v1528
  %1701 = vmatpush.msra.mxu0 %v1524
  %1702 = vmatpush.msra.mxu0 %v1520
  %1703 = vmatpush.msra.mxu0 %v1516
  %1704 = vmatmul.f32.gmra.mxu0 %v1448
  %v1705 = vpop.f32.mrf.mxu0
  %v1706 = vadd.f32 %v1686, %v1705
  %1707 = vdwg.mxu0
  %1708 = vmatpush.msra.mxu0 %v1513
  %1709 = vmatpush.msra.mxu0 %v1509
  %1710 = vmatpush.msra.mxu0 %v1505
  %1711 = vmatpush.msra.mxu0 %v1501
  %1712 = vmatpush.msra.mxu0 %v1497
  %1713 = vmatpush.msra.mxu0 %v1493
  %1714 = vmatpush.msra.mxu0 %v1489
  %1715 = vmatpush.msra.mxu0 %v1485
  %1716 = vmatpush.msra.mxu0 %v1481
  %1717 = vmatpush.msra.mxu0 %v1477
  %1718 = vmatpush.msra.mxu0 %v1473
  %1719 = vmatpush.msra.mxu0 %v1469
  %1720 = vmatpush.msra.mxu0 %v1465
  %1721 = vmatpush.msra.mxu0 %v1461
  %1722 = vmatpush.msra.mxu0 %v1457
  %1723 = vmatpush.msra.mxu0 %v1453
  %1724 = vmatmul.f32.gmra.mxu0 %v1408
  %v1725 = vpop.f32.mrf.mxu0
  %v1726 = vadd.f32 %v1583, %v1725
  %1727 = vdwg.mxu0
  %1728 = vmatpush.msra.mxu0 %v1577
  %1729 = vmatpush.msra.mxu0 %v1573
  %1730 = vmatpush.msra.mxu0 %v1569
  %1731 = vmatpush.msra.mxu0 %v1565
  %1732 = vmatpush.msra.mxu0 %v1561
  %1733 = vmatpush.msra.mxu0 %v1557
  %1734 = vmatpush.msra.mxu0 %v1553
  %1735 = vmatpush.msra.mxu0 %v1549
  %1736 = vmatpush.msra.mxu0 %v1545
  %1737 = vmatpush.msra.mxu0 %v1541
  %1738 = vmatpush.msra.mxu0 %v1537
  %1739 = vmatpush.msra.mxu0 %v1533
  %1740 = vmatpush.msra.mxu0 %v1529
  %1741 = vmatpush.msra.mxu0 %v1525
  %1742 = vmatpush.msra.mxu0 %v1521
  %1743 = vmatpush.msra.mxu0 %v1517
  %1744 = vmatmul.f32.gmra.mxu0 %v1448
  %v1745 = vpop.f32.mrf.mxu0
  %v1746 = vadd.f32 %v1726, %v1745
  %1747 = vdwg.mxu0
  %v1748 = vmax.f32 %v1626, 0.0
  %v1749 = vmax.f32 %v1666, 0.0
  %v1750 = vmax.f32 %v1706, 0.0
  %v1751 = vmax.f32 %v1746, 0.0
  %v1752 = vld [vmem:[%s11] sm:$0xff]
  %v1753 = vld [vmem:[%s11 + $0x8] sm:$0xff]
  %v1754 = vld [vmem:[%s11 + $0x10] sm:$0xff]
  %v1755 = vld [vmem:[%s11 + $0x18] sm:$0xff]
  %v1756 = vld [vmem:[%s11 + $0x20] sm:$0xff]
  %v1757 = vld [vmem:[%s11 + $0x28] sm:$0xff]
  %v1758 = vld [vmem:[%s11 + $0x30] sm:$0xff]
  %v1759 = vld [vmem:[%s11 + $0x38] sm:$0xff]
  %v1760 = vld [vmem:[%s11 + $0x40] sm:$0xff]
  %v1761 = vld [vmem:[%s11 + $0x48] sm:$0xff]
  %v1762 = vld [vmem:[%s11 + $0x50] sm:$0xff]
  %v1763 = vld [vmem:[%s11 + $0x58] sm:$0xff]
  %v1764 = vld [vmem:[%s11 + $0x60] sm:$0xff]
  %v1765 = vld [vmem:[%s11 + $0x68] sm:$0xff]
  %v1766 = vld [vmem:[%s11 + $0x70] sm:$0xff]
  %v1767 = vld [vmem:[%s11 + $0x78] sm:$0xff]
  %v1768 = vld [vmem:[%s11 + $0x80] sm:$0xff]
  %v1769 = vld [vmem:[%s11 + $0x88] sm:$0xff]
  %v1770 = vld [vmem:[%s11 + $0x90] sm:$0xff]
  %v1771 = vld [vmem:[%s11 + $0x98] sm:$0xff]
  %v1772 = vld [vmem:[%s11 + $0xa0] sm:$0xff]
  %v1773 = vld [vmem:[%s11 + $0xa8] sm:$0xff]
  %v1774 = vld [vmem:[%s11 + $0xb0] sm:$0xff]
  %v1775 = vld [vmem:[%s11 + $0xb8] sm:$0xff]
  %v1776 = vld [vmem:[%s11 + $0xc0] sm:$0xff]
  %v1777 = vld [vmem:[%s11 + $0xc8] sm:$0xff]
  %v1778 = vld [vmem:[%s11 + $0xd0] sm:$0xff]
  %v1779 = vld [vmem:[%s11 + $0xd8] sm:$0xff]
  %v1780 = vld [vmem:[%s11 + $0xe0] sm:$0xff]
  %v1781 = vld [vmem:[%s11 + $0xe8] sm:$0xff]
  %v1782 = vld [vmem:[%s11 + $0xf0] sm:$0xff]
  %v1783 = vld [vmem:[%s11 + $0xf8] sm:$0xff]
  %v1784 = vld [vmem:[%s11 + $0x100] sm:$0xff]
  %v1785 = vld [vmem:[%s11 + $0x108] sm:$0xff]
  %v1786 = vld [vmem:[%s11 + $0x110] sm:$0xff]
  %v1787 = vld [vmem:[%s11 + $0x118] sm:$0xff]
  %v1788 = vld [vmem:[%s11 + $0x120] sm:$0xff]
  %v1789 = vld [vmem:[%s11 + $0x128] sm:$0xff]
  %v1790 = vld [vmem:[%s11 + $0x130] sm:$0xff]
  %v1791 = vld [vmem:[%s11 + $0x138] sm:$0xff]
  %v1792 = vld [vmem:[%s11 + $0x140] sm:$0xff]
  %v1793 = vld [vmem:[%s11 + $0x148] sm:$0xff]
  %v1794 = vld [vmem:[%s11 + $0x150] sm:$0xff]
  %v1795 = vld [vmem:[%s11 + $0x158] sm:$0xff]
  %v1796 = vld [vmem:[%s11 + $0x160] sm:$0xff]
  %v1797 = vld [vmem:[%s11 + $0x168] sm:$0xff]
  %v1798 = vld [vmem:[%s11 + $0x170] sm:$0xff]
  %v1799 = vld [vmem:[%s11 + $0x178] sm:$0xff]
  %v1800 = vld [vmem:[%s11 + $0x180] sm:$0xff]
  %v1801 = vld [vmem:[%s11 + $0x188] sm:$0xff]
  %v1802 = vld [vmem:[%s11 + $0x190] sm:$0xff]
  %v1803 = vld [vmem:[%s11 + $0x198] sm:$0xff]
  %v1804 = vld [vmem:[%s11 + $0x1a0] sm:$0xff]
  %v1805 = vld [vmem:[%s11 + $0x1a8] sm:$0xff]
  %v1806 = vld [vmem:[%s11 + $0x1b0] sm:$0xff]
  %v1807 = vld [vmem:[%s11 + $0x1b8] sm:$0xff]
  %v1808 = vld [vmem:[%s11 + $0x1c0] sm:$0xff]
  %v1809 = vld [vmem:[%s11 + $0x1c8] sm:$0xff]
  %v1810 = vld [vmem:[%s11 + $0x1d0] sm:$0xff]
  %v1811 = vld [vmem:[%s11 + $0x1d8] sm:$0xff]
  %v1812 = vld [vmem:[%s11 + $0x1e0] sm:$0xff]
  %v1813 = vld [vmem:[%s11 + $0x1e8] sm:$0xff]
  %v1814 = vld [vmem:[%s11 + $0x1f0] sm:$0xff]
  %v1815 = vld [vmem:[%s11 + $0x1f8] sm:$0xff]
  %v1816 = vld [vmem:[%s11 + $0x200] sm:$0xff]
  %v1817 = vld [vmem:[%s11 + $0x208] sm:$0xff]
  %v1818 = vld [vmem:[%s11 + $0x210] sm:$0xff]
  %v1819 = vld [vmem:[%s11 + $0x218] sm:$0xff]
  %v1820 = vld [vmem:[%s11 + $0x220] sm:$0xff]
  %v1821 = vld [vmem:[%s11 + $0x228] sm:$0xff]
  %v1822 = vld [vmem:[%s11 + $0x230] sm:$0xff]
  %v1823 = vld [vmem:[%s11 + $0x238] sm:$0xff]
  %v1824 = vld [vmem:[%s11 + $0x240] sm:$0xff]
  %v1825 = vld [vmem:[%s11 + $0x248] sm:$0xff]
  %v1826 = vld [vmem:[%s11 + $0x250] sm:$0xff]
  %v1827 = vld [vmem:[%s11 + $0x258] sm:$0xff]
  %v1828 = vld [vmem:[%s11 + $0x260] sm:$0xff]
  %v1829 = vld [vmem:[%s11 + $0x268] sm:$0xff]
  %v1830 = vld [vmem:[%s11 + $0x270] sm:$0xff]
  %v1831 = vld [vmem:[%s11 + $0x278] sm:$0xff]
  %v1832 = vld [vmem:[%s11 + $0x280] sm:$0xff]
  %v1833 = vld [vmem:[%s11 + $0x288] sm:$0xff]
  %v1834 = vld [vmem:[%s11 + $0x290] sm:$0xff]
  %v1835 = vld [vmem:[%s11 + $0x298] sm:$0xff]
  %v1836 = vld [vmem:[%s11 + $0x2a0] sm:$0xff]
  %v1837 = vld [vmem:[%s11 + $0x2a8] sm:$0xff]
  %v1838 = vld [vmem:[%s11 + $0x2b0] sm:$0xff]
  %v1839 = vld [vmem:[%s11 + $0x2b8] sm:$0xff]
  %v1840 = vld [vmem:[%s11 + $0x2c0] sm:$0xff]
  %v1841 = vld [vmem:[%s11 + $0x2c8] sm:$0xff]
  %v1842 = vld [vmem:[%s11 + $0x2d0] sm:$0xff]
  %v1843 = vld [vmem:[%s11 + $0x2d8] sm:$0xff]
  %v1844 = vld [vmem:[%s11 + $0x2e0] sm:$0xff]
  %v1845 = vld [vmem:[%s11 + $0x2e8] sm:$0xff]
  %v1846 = vld [vmem:[%s11 + $0x2f0] sm:$0xff]
  %v1847 = vld [vmem:[%s11 + $0x2f8] sm:$0xff]
  %v1848 = vld [vmem:[%s11 + $0x300] sm:$0xff]
  %v1849 = vld [vmem:[%s11 + $0x308] sm:$0xff]
  %v1850 = vld [vmem:[%s11 + $0x310] sm:$0xff]
  %v1851 = vld [vmem:[%s11 + $0x318] sm:$0xff]
  %v1852 = vld [vmem:[%s11 + $0x320] sm:$0xff]
  %v1853 = vld [vmem:[%s11 + $0x328] sm:$0xff]
  %v1854 = vld [vmem:[%s11 + $0x330] sm:$0xff]
  %v1855 = vld [vmem:[%s11 + $0x338] sm:$0xff]
  %v1856 = vld [vmem:[%s11 + $0x340] sm:$0xff]
  %v1857 = vld [vmem:[%s11 + $0x348] sm:$0xff]
  %v1858 = vld [vmem:[%s11 + $0x350] sm:$0xff]
  %v1859 = vld [vmem:[%s11 + $0x358] sm:$0xff]
  %v1860 = vld [vmem:[%s11 + $0x360] sm:$0xff]
  %v1861 = vld [vmem:[%s11 + $0x368] sm:$0xff]
  %v1862 = vld [vmem:[%s11 + $0x370] sm:$0xff]
  %v1863 = vld [vmem:[%s11 + $0x378] sm:$0xff]
  %v1864 = vld [vmem:[%s11 + $0x380] sm:$0xff]
  %v1865 = vld [vmem:[%s11 + $0x388] sm:$0xff]
  %v1866 = vld [vmem:[%s11 + $0x390] sm:$0xff]
  %v1867 = vld [vmem:[%s11 + $0x398] sm:$0xff]
  %v1868 = vld [vmem:[%s11 + $0x3a0] sm:$0xff]
  %v1869 = vld [vmem:[%s11 + $0x3a8] sm:$0xff]
  %v1870 = vld [vmem:[%s11 + $0x3b0] sm:$0xff]
  %v1871 = vld [vmem:[%s11 + $0x3b8] sm:$0xff]
  %v1872 = vld [vmem:[%s11 + $0x3c0] sm:$0xff]
  %v1873 = vld [vmem:[%s11 + $0x3c8] sm:$0xff]
  %v1874 = vld [vmem:[%s11 + $0x3d0] sm:$0xff]
  %v1875 = vld [vmem:[%s11 + $0x3d8] sm:$0xff]
  %v1876 = vld [vmem:[%s11 + $0x3e0] sm:$0xff]
  %v1877 = vld [vmem:[%s11 + $0x3e8] sm:$0xff]
  %v1878 = vld [vmem:[%s11 + $0x3f0] sm:$0xff]
  %v1879 = vld [vmem:[%s11 + $0x3f8] sm:$0xff]
  %v1880 = vld [vmem:[%s12] sm:$0x3]
  %v1882 = vperm.slane %v1880, 0
  %v1883 = vperm.slane %v1880, 1
  %1886 = vmatpush.msra.mxu0 %v1782
  %1887 = vmatpush.msra.mxu0 %v1780
  %1888 = vmatpush.msra.mxu0 %v1778
  %1889 = vmatpush.msra.mxu0 %v1776
  %1890 = vmatpush.msra.mxu0 %v1774
  %1891 = vmatpush.msra.mxu0 %v1772
  %1892 = vmatpush.msra.mxu0 %v1770
  %1893 = vmatpush.msra.mxu0 %v1768
  %1894 = vmatpush.msra.mxu0 %v1766
  %1895 = vmatpush.msra.mxu0 %v1764
  %1896 = vmatpush.msra.mxu0 %v1762
  %1897 = vmatpush.msra.mxu0 %v1760
  %1898 = vmatpush.msra.mxu0 %v1758
  %1899 = vmatpush.msra.mxu0 %v1756
  %1900 = vmatpush.msra.mxu0 %v1754
  %1901 = vmatpush.msra.mxu0 %v1752
  %1902 = vmatmul.f32.gmra.mxu0 %v1748
  %v1903 = vpop.f32.mrf.mxu0
  %v1904 = vadd.f32 %v1882, %v1903
  %1905 = vdwg.mxu0
  %1906 = vmatpush.msra.mxu0 %v1814
  %1907 = vmatpush.msra.mxu0 %v1812
  %1908 = vmatpush.msra.mxu0 %v1810
  %1909 = vmatpush.msra.mxu0 %v1808
  %1910 = vmatpush.msra.mxu0 %v1806
  %1911 = vmatpush.msra.mxu0 %v1804
  %1912 = vmatpush.msra.mxu0 %v1802
  %1913 = vmatpush.msra.mxu0 %v1800
  %1914 = vmatpush.msra.mxu0 %v1798
  %1915 = vmatpush.msra.mxu0 %v1796
  %1916 = vmatpush.msra.mxu0 %v1794
  %1917 = vmatpush.msra.mxu0 %v1792
  %1918 = vmatpush.msra.mxu0 %v1790
  %1919 = vmatpush.msra.mxu0 %v1788
  %1920 = vmatpush.msra.mxu0 %v1786
  %1921 = vmatpush.msra.mxu0 %v1784
  %1922 = vmatmul.f32.gmra.mxu0 %v1749
  %v1923 = vpop.f32.mrf.mxu0
  %v1924 = vadd.f32 %v1904, %v1923
  %1925 = vdwg.mxu0
  %1926 = vmatpush.msra.mxu0 %v1846
  %1927 = vmatpush.msra.mxu0 %v1844
  %1928 = vmatpush.msra.mxu0 %v1842
  %1929 = vmatpush.msra.mxu0 %v1840
  %1930 = vmatpush.msra.mxu0 %v1838
  %1931 = vmatpush.msra.mxu0 %v1836
  %1932 = vmatpush.msra.mxu0 %v1834
  %1933 = vmatpush.msra.mxu0 %v1832
  %1934 = vmatpush.msra.mxu0 %v1830
  %1935 = vmatpush.msra.mxu0 %v1828
  %1936 = vmatpush.msra.mxu0 %v1826
  %1937 = vmatpush.msra.mxu0 %v1824
  %1938 = vmatpush.msra.mxu0 %v1822
  %1939 = vmatpush.msra.mxu0 %v1820
  %1940 = vmatpush.msra.mxu0 %v1818
  %1941 = vmatpush.msra.mxu0 %v1816
  %1942 = vmatmul.f32.gmra.mxu0 %v1750
  %v1943 = vpop.f32.mrf.mxu0
  %v1944 = vadd.f32 %v1924, %v1943
  %1945 = vdwg.mxu0
  %1946 = vmatpush.msra.mxu0 %v1878
  %1947 = vmatpush.msra.mxu0 %v1876
  %1948 = vmatpush.msra.mxu0 %v1874
  %1949 = vmatpush.msra.mxu0 %v1872
  %1950 = vmatpush.msra.mxu0 %v1870
  %1951 = vmatpush.msra.mxu0 %v1868
  %1952 = vmatpush.msra.mxu0 %v1866
  %1953 = vmatpush.msra.mxu0 %v1864
  %1954 = vmatpush.msra.mxu0 %v1862
  %1955 = vmatpush.msra.mxu0 %v1860
  %1956 = vmatpush.msra.mxu0 %v1858
  %1957 = vmatpush.msra.mxu0 %v1856
  %1958 = vmatpush.msra.mxu0 %v1854
  %1959 = vmatpush.msra.mxu0 %v1852
  %1960 = vmatpush.msra.mxu0 %v1850
  %1961 = vmatpush.msra.mxu0 %v1848
  %1962 = vmatmul.f32.gmra.mxu0 %v1751
  %v1963 = vpop.f32.mrf.mxu0
  %v1964 = vadd.f32 %v1944, %v1963
  %1965 = vdwg.mxu0
  %1966 = vmatpush.msra.mxu0 %v1783
  %1967 = vmatpush.msra.mxu0 %v1781
  %1968 = vmatpush.msra.mxu0 %v1779
  %1969 = vmatpush.msra.mxu0 %v1777
  %1970 = vmatpush.msra.mxu0 %v1775
  %1971 = vmatpush.msra.mxu0 %v1773
  %1972 = vmatpush.msra.mxu0 %v1771
  %1973 = vmatpush.msra.mxu0 %v1769
  %1974 = vmatpush.msra.mxu0 %v1767
  %1975 = vmatpush.msra.mxu0 %v1765
  %1976 = vmatpush.msra.mxu0 %v1763
  %1977 = vmatpush.msra.mxu0 %v1761
  %1978 = vmatpush.msra.mxu0 %v1759
  %1979 = vmatpush.msra.mxu0 %v1757
  %1980 = vmatpush.msra.mxu0 %v1755
  %1981 = vmatpush.msra.mxu0 %v1753
  %1982 = vmatmul.f32.gmra.mxu0 %v1748
  %v1983 = vpop.f32.mrf.mxu0
  %v1984 = vadd.f32 %v1883, %v1983
  %1985 = vdwg.mxu0
  %1986 = vmatpush.msra.mxu0 %v1815
  %1987 = vmatpush.msra.mxu0 %v1813
  %1988 = vmatpush.msra.mxu0 %v1811
  %1989 = vmatpush.msra.mxu0 %v1809
  %1990 = vmatpush.msra.mxu0 %v1807
  %1991 = vmatpush.msra.mxu0 %v1805
  %1992 = vmatpush.msra.mxu0 %v1803
  %1993 = vmatpush.msra.mxu0 %v1801
  %1994 = vmatpush.msra.mxu0 %v1799
  %1995 = vmatpush.msra.mxu0 %v1797
  %1996 = vmatpush.msra.mxu0 %v1795
  %1997 = vmatpush.msra.mxu0 %v1793
  %1998 = vmatpush.msra.mxu0 %v1791
  %1999 = vmatpush.msra.mxu0 %v1789
  %2000 = vmatpush.msra.mxu0 %v1787
  %2001 = vmatpush.msra.mxu0 %v1785
  %2002 = vmatmul.f32.gmra.mxu0 %v1749
  %v2003 = vpop.f32.mrf.mxu0
  %v2004 = vadd.f32 %v1984, %v2003
  %2005 = vdwg.mxu0
  %2006 = vmatpush.msra.mxu0 %v1847
  %2007 = vmatpush.msra.mxu0 %v1845
  %2008 = vmatpush.msra.mxu0 %v1843
  %2009 = vmatpush.msra.mxu0 %v1841
  %2010 = vmatpush.msra.mxu0 %v1839
  %2011 = vmatpush.msra.mxu0 %v1837
  %2012 = vmatpush.msra.mxu0 %v1835
  %2013 = vmatpush.msra.mxu0 %v1833
  %2014 = vmatpush.msra.mxu0 %v1831
  %2015 = vmatpush.msra.mxu0 %v1829
  %2016 = vmatpush.msra.mxu0 %v1827
  %2017 = vmatpush.msra.mxu0 %v1825
  %2018 = vmatpush.msra.mxu0 %v1823
  %2019 = vmatpush.msra.mxu0 %v1821
  %2020 = vmatpush.msra.mxu0 %v1819
  %2021 = vmatpush.msra.mxu0 %v1817
  %2022 = vmatmul.f32.gmra.mxu0 %v1750
  %v2023 = vpop.f32.mrf.mxu0
  %v2024 = vadd.f32 %v2004, %v2023
  %2025 = vdwg.mxu0
  %2026 = vmatpush.msra.mxu0 %v1879
  %2027 = vmatpush.msra.mxu0 %v1877
  %2028 = vmatpush.msra.mxu0 %v1875
  %2029 = vmatpush.msra.mxu0 %v1873
  %2030 = vmatpush.msra.mxu0 %v1871
  %2031 = vmatpush.msra.mxu0 %v1869
  %2032 = vmatpush.msra.mxu0 %v1867
  %2033 = vmatpush.msra.mxu0 %v1865
  %2034 = vmatpush.msra.mxu0 %v1863
  %2035 = vmatpush.msra.mxu0 %v1861
  %2036 = vmatpush.msra.mxu0 %v1859
  %2037 = vmatpush.msra.mxu0 %v1857
  %2038 = vmatpush.msra.mxu0 %v1855
  %2039 = vmatpush.msra.mxu0 %v1853
  %2040 = vmatpush.msra.mxu0 %v1851
  %2041 = vmatpush.msra.mxu0 %v1849
  %2042 = vmatmul.f32.gmra.mxu0 %v1751
  %v2043 = vpop.f32.mrf.mxu0
  %v2044 = vadd.f32 %v2024, %v2043
  %2045 = vdwg.mxu0
  %v2046 = vmax.f32 %v1964, 0.0
  %v2047 = vmax.f32 %v2044, 0.0
  %v2048 = vld [vmem:[%s13] sm:$0xff]
  %v2049 = vld [vmem:[%s13 + $0x8] sm:$0xff]
  %v2050 = vld [vmem:[%s13 + $0x10] sm:$0xff]
  %v2051 = vld [vmem:[%s13 + $0x18] sm:$0xff]
  %v2052 = vld [vmem:[%s13 + $0x20] sm:$0xff]
  %v2053 = vld [vmem:[%s13 + $0x28] sm:$0xff]
  %v2054 = vld [vmem:[%s13 + $0x30] sm:$0xff]
  %v2055 = vld [vmem:[%s13 + $0x38] sm:$0xff]
  %v2056 = vld [vmem:[%s13 + $0x40] sm:$0xff]
  %v2057 = vld [vmem:[%s13 + $0x48] sm:$0xff]
  %v2058 = vld [vmem:[%s13 + $0x50] sm:$0xff]
  %v2059 = vld [vmem:[%s13 + $0x58] sm:$0xff]
  %v2060 = vld [vmem:[%s13 + $0x60] sm:$0xff]
  %v2061 = vld [vmem:[%s13 + $0x68] sm:$0xff]
  %v2062 = vld [vmem:[%s13 + $0x70] sm:$0xff]
  %v2063 = vld [vmem:[%s13 + $0x78] sm:$0xff]
  %v2064 = vld [vmem:[%s13 + $0x80] sm:$0xff]
  %v2065 = vld [vmem:[%s13 + $0x88] sm:$0xff]
  %v2066 = vld [vmem:[%s13 + $0x90] sm:$0xff]
  %v2067 = vld [vmem:[%s13 + $0x98] sm:$0xff]
  %v2068 = vld [vmem:[%s13 + $0xa0] sm:$0xff]
  %v2069 = vld [vmem:[%s13 + $0xa8] sm:$0xff]
  %v2070 = vld [vmem:[%s13 + $0xb0] sm:$0xff]
  %v2071 = vld [vmem:[%s13 + $0xb8] sm:$0xff]
  %v2072 = vld [vmem:[%s13 + $0xc0] sm:$0xff]
  %v2073 = vld [vmem:[%s13 + $0xc8] sm:$0xff]
  %v2074 = vld [vmem:[%s13 + $0xd0] sm:$0xff]
  %v2075 = vld [vmem:[%s13 + $0xd8] sm:$0xff]
  %v2076 = vld [vmem:[%s13 + $0xe0] sm:$0xff]
  %v2077 = vld [vmem:[%s13 + $0xe8] sm:$0xff]
  %v2078 = vld [vmem:[%s13 + $0xf0] sm:$0xff]
  %v2079 = vld [vmem:[%s13 + $0xf8] sm:$0xff]
  %v2080 = vld [vmem:[%s14] sm:$0x1]
  %v2082 = vperm.slane %v2080, 0
  %2084 = vmatpush.msra.mxu0 %v2063
  %2085 = vmatpush.msra.mxu0 %v2062
  %2086 = vmatpush.msra.mxu0 %v2061
  %2087 = vmatpush.msra.mxu0 %v2060
  %2088 = vmatpush.msra.mxu0 %v2059
  %2089 = vmatpush.msra.mxu0 %v2058
  %2090 = vmatpush.msra.mxu0 %v2057
  %2091 = vmatpush.msra.mxu0 %v2056
  %2092 = vmatpush.msra.mxu0 %v2055
  %2093 = vmatpush.msra.mxu0 %v2054
  %2094 = vmatpush.msra.mxu0 %v2053
  %2095 = vmatpush.msra.mxu0 %v2052
  %2096 = vmatpush.msra.mxu0 %v2051
  %2097 = vmatpush.msra.mxu0 %v2050
  %2098 = vmatpush.msra.mxu0 %v2049
  %2099 = vmatpush.msra.mxu0 %v2048
  %2100 = vmatmul.f32.gmra.mxu0 %v2046
  %v2101 = vpop.f32.mrf.mxu0
  %v2102 = vadd.f32 %v2082, %v2101
  %2103 = vdwg.mxu0
  %2104 = vmatpush.msra.mxu0 %v2079
  %2105 = vmatpush.msra.mxu0 %v2078
  %2106 = vmatpush.msra.mxu0 %v2077
  %2107 = vmatpush.msra.mxu0 %v2076
  %2108 = vmatpush.msra.mxu0 %v2075
  %2109 = vmatpush.msra.mxu0 %v2074
  %2110 = vmatpush.msra.mxu0 %v2073
  %2111 = vmatpush.msra.mxu0 %v2072
  %2112 = vmatpush.msra.mxu0 %v2071
  %2113 = vmatpush.msra.mxu0 %v2070
  %2114 = vmatpush.msra.mxu0 %v2069
  %2115 = vmatpush.msra.mxu0 %v2068
  %2116 = vmatpush.msra.mxu0 %v2067
  %2117 = vmatpush.msra.mxu0 %v2066
  %2118 = vmatpush.msra.mxu0 %v2065
  %2119 = vmatpush.msra.mxu0 %v2064
  %2120 = vmatmul.f32.gmra.mxu0 %v2047
  %v2121 = vpop.f32.mrf.mxu0
  %v2122 = vadd.f32 %v2102, %v2121
  %2123 = vdwg.mxu0
  %2124 = vst [vmem:[%s15] sm:$0xff] %v2122
  // Predicated region
  $region62: #{forward.1} parent=0 // pred_check
    _
  $region63: #{forward.1} parent=0 // pred_check_branch
    %2126 = sbr.rel (0) target = $region65
  $region64: #{forward.1} parent=0 // pred_region
    _
  $region65: #{forward.1} parent=0 // pred_fallthru
    _
  // Predicated region
  $region66: #{forward.1} parent=0 // pred_check
    _
  $region67: #{forward.1} parent=0 // pred_check_branch
    %2128 = sbr.rel (0) target = $region69
  $region68: #{forward.1} parent=0 // pred_region
    _
  $region69: #{forward.1} parent=0 // pred_fallthru
    _

</llo_original>
